<compile_context>
chip_gen: v6e
topology: v6e:2x2x1
jax: 0.10.0
libtpu: 0.0.40
codegen_flags: <defaults>
</compile_context>

<pallas_src>
import functools

import jax
import jax.numpy as jnp
from jax import lax
from jax.experimental import pallas as pl
from jax.experimental.pallas import tpu as pltpu


def _self_attention_kernel(x_cn_ref, x_nc_ref, w_ref, b_ref, out_ref, *, attn_dim):
    # x_cn_ref: (1, C, N) channel-first view of x (lane-dense, N on lanes)
    # x_nc_ref: (1, N, C) raw (N, C) view of the same x buffer (for the residual)
    # w_ref:    (2A+C, C) fused [wq; wk; wv] 1x1-conv weights
    # b_ref:    (2A+C, 1) fused biases
    # out_ref:  (1, N, C) raw layout of torch's (B, N, C) residual output
    A = attn_dim
    x_cn = x_cn_ref[0]                                    # (C, N)

    # Fused QKV projection: (2A+C, C) @ (C, N) -> (2A+C, N), bias broadcast on lanes.
    qkv = jnp.dot(w_ref[...], x_cn,
                  preferred_element_type=jnp.float32) + b_ref[...]
    qT = qkv[0:A]                                         # (A, N)
    kT = qkv[A:2 * A]                                     # (A, N)
    vT = qkv[2 * A:]                                      # (C, N)

    # att[n, m] = sum_a qT[a, n] * kT[a, m]  -> (N, N)
    att = lax.dot_general(qT, kT, (((0,), (0,)), ((), ())),
                          preferred_element_type=jnp.float32)

    # torch.nn.Softmax(dim=-2): normalize each column over the row axis (axis 0).
    # (Keep the reduction on axis 0: rows stack across vregs -> cheap VPU adds.)
    p = jnp.exp(att - jnp.max(att, axis=0, keepdims=True))
    denom = jnp.sum(p, axis=0, keepdims=True)
    att = p * pl.reciprocal(denom, approx=False)          # exact; keeps 1e-4 tolerance

    # out_bnc[n, c] = sum_m att[n, m] * vT[c, m]  -> (N, C)  (torch's bmm output)
    out_bnc = lax.dot_general(att, vT, (((1,), (1,)), ((), ())),
                              preferred_element_type=jnp.float32)

    # Fused residual in raw (N, C) coords: torch's out.view(B,C,H,W) is a raw
    # reshape, so x_raw + 0.1*out_bnc reshaped back to NCHW is exactly x + 0.1*out.
    out_ref[0] = (x_nc_ref[0] + 0.1 * out_bnc).astype(out_ref.dtype)


def self_attention(x_nchw, wq, bq, wk, bk, wv, bv):
    """Forward pass matching the PyTorch module exactly.

    x_nchw: (B, C, H, W) float32
    wq, wk: (A, C, 1, 1), wv: (C, C, 1, 1); bq, bk: (A,), bv: (C,)
    """
    B, C, H, W = x_nchw.shape
    N = H * W
    A = wq.shape[0]

    # Both are free bitcast reshapes of the contiguous NCHW buffer.
    x_cn = x_nchw.reshape(B, C, N)        # channel-first (lane-dense) operand
    x_nc = x_nchw.reshape(B, N, C)        # raw (N, C) view for the fused residual

    # Fuse the three 1x1-conv projections into one (2A+C, C) weight / bias.
    w_all = jnp.concatenate(
        [wq.reshape(A, C), wk.reshape(A, C), wv.reshape(C, C)], axis=0)
    b_all = jnp.concatenate([bq, bk, bv]).reshape(2 * A + C, 1)

    kernel = functools.partial(_self_attention_kernel, attn_dim=A)

    # TODO(synk): for large H*W the (N, N) attention tile will not fit VMEM
    # (64 MiB on v7x); add a key-axis grid dimension with an accumulator.
    out_raw = pl.pallas_call(
        kernel,
        out_shape=jax.ShapeDtypeStruct((B, N, C), jnp.float32),
        grid_spec=pltpu.PrefetchScalarGridSpec(
            num_scalar_prefetch=0,
            grid=(B,),
            in_specs=[
                pl.BlockSpec((1, C, N), lambda b: (b, 0, 0)),     # x channel-first
                pl.BlockSpec((1, N, C), lambda b: (b, 0, 0)),     # x raw view
                pl.BlockSpec((2 * A + C, C), lambda b: (0, 0)),   # fused weights
                pl.BlockSpec((2 * A + C, 1), lambda b: (0, 0)),   # fused biases
            ],
            out_specs=pl.BlockSpec((1, N, C), lambda b: (b, 0, 0)),
        ),
        compiler_params=pltpu.CompilerParams(
            # One batch element per grid step; parallel so v7x's 2 TCs split B.
            dimension_semantics=("parallel",)),
    )(x_cn, x_nc, w_all, b_all)

    # torch: out.view(B, C, H, W) of the (B, N, C) buffer — a raw reshape (free).
    return out_raw.reshape(B, C, H, W)


def ref_self_attention(x, wq, bq, wk, bk, wv, bv):
    """Pure-JAX reference mirroring the PyTorch forward exactly."""
    B, C, H, W = x.shape
    N = H * W
    A = wq.shape[0]
    xf = x.reshape(B, C, N)
    q = jnp.einsum('ac,bcn->ban', wq.reshape(A, C), xf) + bq[None, :, None]   # (B, A, N)
    k = jnp.einsum('ac,bcn->ban', wk.reshape(A, C), xf) + bk[None, :, None]   # (B, A, N)
    v = jnp.einsum('oc,bcn->bon', wv.reshape(C, C), xf) + bv[None, :, None]   # (B, C, N)
    query = q.transpose(0, 2, 1)                                              # (B, N, A)
    value = v.transpose(0, 2, 1)                                              # (B, N, C)
    att = jnp.einsum('bna,bam->bnm', query, k)                                # (B, N, N)
    att = jax.nn.softmax(att, axis=-2)
    out = jnp.einsum('bnm,bmc->bnc', att, value)                              # (B, N, C)
    out = out.reshape(B, C, H, W)                                             # raw view
    return x + 0.1 * out


if __name__ == "__main__":
    B, C, A, H, W = 2, 4, 8, 16, 16

    key = jax.random.PRNGKey(0)
    kx, k1, k2, k3 = jax.random.split(key, 4)

    x = jax.random.normal(kx, (B, C, H, W), dtype=jnp.float32)

    # kaiming_normal_(mode='fan_out', nonlinearity='relu') on 1x1 conv:
    # std = sqrt(2 / out_channels); biases are constant 0.
    wq = jax.random.normal(k1, (A, C, 1, 1), dtype=jnp.float32) * jnp.sqrt(2.0 / A)
    wk = jax.random.normal(k2, (A, C, 1, 1), dtype=jnp.float32) * jnp.sqrt(2.0 / A)
    wv = jax.random.normal(k3, (C, C, 1, 1), dtype=jnp.float32) * jnp.sqrt(2.0 / C)
    bq = jnp.zeros((A,), jnp.float32)
    bk = jnp.zeros((A,), jnp.float32)
    bv = jnp.zeros((C,), jnp.float32)

    out = self_attention(x, wq, bq, wk, bk, wv, bv)
    jax.block_until_ready(out)

    ref = ref_self_attention(x, wq, bq, wk, bk, wv, bv)
    assert out.shape == (B, C, H, W)
    assert jnp.allclose(out, ref, atol=1e-4, rtol=1e-4), \
        float(jnp.max(jnp.abs(out - ref)))

    print("KERNEL_OK")
</pallas_src>

<mosaic_0001>
module attributes {stable_mosaic.version = 11 : i64} {
  func.func @_self_attention_kernel(%arg0: i32, %arg1: memref<1x4x256xf32, #tpu.memory_space<vmem>>, %arg2: memref<1x256x4xf32, #tpu.memory_space<vmem>>, %arg3: memref<20x4xf32, #tpu.memory_space<vmem>>, %arg4: memref<20x1xf32, #tpu.memory_space<vmem>>, %arg5: memref<1x256x4xf32, #tpu.memory_space<vmem>>) attributes {dimension_semantics = [#tpu.dimension_semantics<parallel>], iteration_bounds = array<i64: 2>, scalar_prefetch = 0 : i64, scratch_operands = 0 : i64, tpu.core_type = #tpu.core_type<tc>, window_params = [{transform_indices = @transform_0, window_bounds = array<i64: 1, 4, 256>}, {transform_indices = @transform_1, window_bounds = array<i64: 1, 256, 4>}, {pipeline_mode = #tpu.pipeline_mode<synchronous>, transform_indices = @transform_2, window_bounds = array<i64: 20, 4>}, {pipeline_mode = #tpu.pipeline_mode<synchronous>, transform_indices = @transform_3, window_bounds = array<i64: 20, 1>}, {transform_indices = @transform_4, window_bounds = array<i64: 1, 256, 4>}]} {
    %c0 = arith.constant 0 : index
    %c0_0 = arith.constant 0 : index
    %c0_1 = arith.constant 0 : index
    %0 = vector.load %arg1[%c0, %c0_0, %c0_1] : memref<1x4x256xf32, #tpu.memory_space<vmem>>, vector<1x4x256xf32>
    %1 = vector.shape_cast %0 : vector<1x4x256xf32> to vector<4x256xf32>
    %c0_2 = arith.constant 0 : index
    %c0_3 = arith.constant 0 : index
    %2 = vector.load %arg3[%c0_2, %c0_3] : memref<20x4xf32, #tpu.memory_space<vmem>>, vector<20x4xf32>
    %cst = arith.constant dense<0.000000e+00> : vector<20x256xf32>
    %3 = tpu.matmul %2, %1, %cst {dimension_numbers = #tpu.dot_dimension_numbers<[1], [0], [0], [1], [0, 0, 1, 1], [], []>} : vector<20x4xf32>, vector<4x256xf32>, vector<20x256xf32> -> vector<20x256xf32>
    %c0_4 = arith.constant 0 : index
    %c0_5 = arith.constant 0 : index
    %4 = vector.load %arg4[%c0_4, %c0_5] : memref<20x1xf32, #tpu.memory_space<vmem>>, vector<20x1xf32>
    %5 = vector.broadcast %4 : vector<20x1xf32> to vector<20x256xf32>
    %6 = arith.addf %3, %5 : vector<20x256xf32>
    %7 = vector.extract_strided_slice %6 {offsets = [0, 0], sizes = [8, 256], strides = [1, 1]} : vector<20x256xf32> to vector<8x256xf32>
    %8 = vector.extract_strided_slice %6 {offsets = [8, 0], sizes = [8, 256], strides = [1, 1]} : vector<20x256xf32> to vector<8x256xf32>
    %9 = vector.extract_strided_slice %6 {offsets = [16, 0], sizes = [4, 256], strides = [1, 1]} : vector<20x256xf32> to vector<4x256xf32>
    %cst_6 = arith.constant dense<0.000000e+00> : vector<256x256xf32>
    %10 = tpu.matmul %7, %8, %cst_6 {dimension_numbers = #tpu.dot_dimension_numbers<[0], [0], [1], [1], [0, 1, 1, 1], [], []>} : vector<8x256xf32>, vector<8x256xf32>, vector<256x256xf32> -> vector<256x256xf32>
    %cst_7 = arith.constant dense<0xFF800000> : vector<256xf32>
    %11 = vector.multi_reduction <maximumf>, %10, %cst_7 [0] : vector<256x256xf32> to vector<256xf32>
    %12 = vector.shape_cast %11 : vector<256xf32> to vector<1x256xf32>
    %13 = vector.broadcast %12 : vector<1x256xf32> to vector<256x256xf32>
    %14 = arith.subf %10, %13 : vector<256x256xf32>
    %15 = math.exp %14 : vector<256x256xf32>
    %cst_8 = arith.constant dense<0.000000e+00> : vector<256xf32>
    %16 = vector.multi_reduction <add>, %15, %cst_8 [0] : vector<256x256xf32> to vector<256xf32>
    %17 = vector.shape_cast %16 : vector<256xf32> to vector<1x256xf32>
    %18 = tpu.reciprocal %17 : vector<1x256xf32> -> vector<1x256xf32>
    %19 = vector.broadcast %18 : vector<1x256xf32> to vector<256x256xf32>
    %20 = arith.mulf %15, %19 : vector<256x256xf32>
    %cst_9 = arith.constant dense<0.000000e+00> : vector<256x4xf32>
    %21 = tpu.matmul %20, %9, %cst_9 {dimension_numbers = #tpu.dot_dimension_numbers<[1], [1], [0], [0], [0, 0, 1, 0], [], []>} : vector<256x256xf32>, vector<4x256xf32>, vector<256x4xf32> -> vector<256x4xf32>
    %c0_10 = arith.constant 0 : index
    %c0_11 = arith.constant 0 : index
    %c0_12 = arith.constant 0 : index
    %22 = vector.load %arg2[%c0_10, %c0_11, %c0_12] : memref<1x256x4xf32, #tpu.memory_space<vmem>>, vector<1x256x4xf32>
    %23 = vector.shape_cast %22 : vector<1x256x4xf32> to vector<256x4xf32>
    %cst_13 = arith.constant 1.000000e-01 : f32
    %24 = vector.broadcast %cst_13 : f32 to vector<256x4xf32>
    %25 = arith.mulf %24, %21 : vector<256x4xf32>
    %26 = arith.addf %23, %25 : vector<256x4xf32>
    %c0_14 = arith.constant 0 : index
    %c0_15 = arith.constant 0 : index
    %c0_16 = arith.constant 0 : index
    %27 = vector.load %arg5[%c0_14, %c0_15, %c0_16] : memref<1x256x4xf32, #tpu.memory_space<vmem>>, vector<1x256x4xf32>
    %28 = vector.shape_cast %27 : vector<1x256x4xf32> to vector<256x4xf32>
    %29 = vector.shape_cast %26 : vector<256x4xf32> to vector<1x256x4xf32>
    tpu.vector_store %arg5[%c0_14, %c0_15, %c0_16], %29 {strides = array<i32>} : memref<1x256x4xf32, #tpu.memory_space<vmem>>, vector<1x256x4xf32>,
    return
  }
  func.func @transform_0(%arg0: i32) -> (i32, i32, i32) {
    %c0_i32 = arith.constant 0 : i32
    %c0_i32_0 = arith.constant 0 : i32
    %c0_i32_1 = arith.constant 0 : i32
    return %arg0, %c0_i32, %c0_i32_0 : i32, i32, i32
  }
  func.func @transform_1(%arg0: i32) -> (i32, i32, i32) {
    %c0_i32 = arith.constant 0 : i32
    %c0_i32_0 = arith.constant 0 : i32
    %c0_i32_1 = arith.constant 0 : i32
    return %arg0, %c0_i32, %c0_i32_0 : i32, i32, i32
  }
  func.func @transform_2(%arg0: i32) -> (i32, i32) {
    %c0_i32 = arith.constant 0 : i32
    %c0_i32_0 = arith.constant 0 : i32
    %c0_i32_1 = arith.constant 0 : i32
    return %c0_i32, %c0_i32_0 : i32, i32
  }
  func.func @transform_3(%arg0: i32) -> (i32, i32) {
    %c0_i32 = arith.constant 0 : i32
    %c0_i32_0 = arith.constant 0 : i32
    %c0_i32_1 = arith.constant 0 : i32
    return %c0_i32, %c0_i32_0 : i32, i32
  }
  func.func @transform_4(%arg0: i32) -> (i32, i32, i32) {
    %c0_i32 = arith.constant 0 : i32
    %c0_i32_0 = arith.constant 0 : i32
    %c0_i32_1 = arith.constant 0 : i32
    return %arg0, %c0_i32, %c0_i32_0 : i32, i32, i32
  }
}

</mosaic_0001>

<llo_original>
// kernel: tpu_custom_call.1
$region0: #{tpu_custom_call.1}
  #allocation0 [shape = 'u32[]', space=smem, size = 0x4, offset = 0x4, fixed_abs, tag = 'smem constant byte address 0x4 - core index']
  #allocation1 [shape = 'u32[144,128]{1,0:T(1,128)}', space=vmem, size = 0x12000, scoped, tag = 'internal scratch']
  %s0 = inlined_call_operand.vmem [shape: f32[2,4,256], index: 0, kind: input, shape index: {}]
  %s1 = inlined_call_operand.vmem [shape: f32[2,256,4], index: 1, kind: input, shape index: {}]
  %s2 = inlined_call_operand.vmem [shape: f32[20,4], index: 2, kind: input, shape index: {}]
  %s3 = inlined_call_operand.vmem [shape: f32[20,1], index: 3, kind: input, shape index: {}]
  %s4 = inlined_call_operand.vmem [shape: f32[2,256,4], index: 4, kind: output, shape index: {}]
  %s5 = sld [smem:[#allocation0]]
  $region49: #{tpu_custom_call.1} parent=0
    _
  %s7 = ssub.s32 1, %s5
  %s8 = scalar_select 0, %s7, %s5
  loop: start=0, step=1, limit=4
  $region2: #{tpu_custom_call.1} parent=0 // loop_pre_header
    _
  $region3: #{tpu_custom_call.1} parent=0 // loop_header
    %s10 = sphi 0, %s14
    %p11 = scmp.ge.s32.totalorder %s10, 4
    %s20 = sphi 0, %s22
    %s23 = sphi 0, %s20
    %s24 = sphi 0, %s23
    %s40 = sphi 0, %s24
    %s46 = sphi 0, %s48
    %s49 = sphi 0, %s46
    %s50 = sphi 0, %s49
    %s66 = sphi 0, %s50
    %s70 = sphi 0, %s70
    %s72 = sphi 0, %s70
    %s73 = sphi 0, %s72
    %s87 = sphi 0, %s73
    %s91 = sphi 0, %s91
    %s93 = sphi 0, %s91
    %s94 = sphi 0, %s93
    %s108 = sphi 0, %s94
    %s114 = sphi 0, %s116
    %s117 = sphi 0, %s114
    %s118 = sphi 0, %s117
    %s134 = sphi 0, %s118
  $region4: #{tpu_custom_call.1} parent=0 // loop_header_branch
    %13 = sbr.rel (%p11) target = $region8
  $region5: #{tpu_custom_call.1} parent=0 // loop_body
    %s15 = ssub.s32 %s10, 1
    %s16 = ssub.s32 %s10, 2
    %s17 = sadd.s32 %s10, 1
    %s18 = ssub.s32 %s10, %s17
    %p19 = scmp.eq.s32.totalorder %s18, 0
    %s21 = sadd.s32 %s20, 1
    %s22 = scalar_select %p19, %s20, %s21
    %p25 = pneg %p19
    %p26 = scmp.eq.s32.totalorder %s10, 1
    %p27 = por %p25, %p26
    %p28 = scmp.ne.s32.totalorder %s20, %s23
    %p29 = scmp.eq.s32.totalorder %s10, 0
    %p30 = por %p28, %p29
    %p31 = scmp.ne.s32.totalorder %s20, %s23
    %p32 = scmp.eq.s32.totalorder %s15, 1
    %p33 = por %p31, %p32
    %p34 = scmp.ne.s32.totalorder %s23, %s24
    %p35 = scmp.eq.s32.totalorder %s15, 0
    %p36 = por %p34, %p35
    %p37 = scmp.ne.s32.totalorder %s23, %s24
    %p38 = scmp.eq.s32.totalorder %s16, 1
    %p39 = por %p37, %p38
    %p41 = scmp.ne.s32.totalorder %s24, %s40
    %p42 = scmp.eq.s32.totalorder %s16, 0
    %p43 = por %p41, %p42
    %s44 = ssub.s32 %s10, %s17
    %p45 = scmp.eq.s32.totalorder %s44, 0
    %s47 = sadd.s32 %s46, 1
    %s48 = scalar_select %p45, %s46, %s47
    %p51 = pneg %p45
    %p52 = scmp.eq.s32.totalorder %s10, 1
    %p53 = por %p51, %p52
    %p54 = scmp.ne.s32.totalorder %s46, %s49
    %p55 = scmp.eq.s32.totalorder %s10, 0
    %p56 = por %p54, %p55
    %p57 = scmp.ne.s32.totalorder %s46, %s49
    %p58 = scmp.eq.s32.totalorder %s15, 1
    %p59 = por %p57, %p58
    %p60 = scmp.ne.s32.totalorder %s49, %s50
    %p61 = scmp.eq.s32.totalorder %s15, 0
    %p62 = por %p60, %p61
    %p63 = scmp.ne.s32.totalorder %s49, %s50
    %p64 = scmp.eq.s32.totalorder %s16, 1
    %p65 = por %p63, %p64
    %p67 = scmp.ne.s32.totalorder %s50, %s66
    %p68 = scmp.eq.s32.totalorder %s16, 0
    %p69 = por %p67, %p68
    %s71 = sadd.s32 %s70, 1
    %p74 = scmp.eq.s32.totalorder %s10, 1
    %p75 = scmp.ne.s32.totalorder %s70, %s72
    %p76 = scmp.eq.s32.totalorder %s10, 0
    %p77 = por %p75, %p76
    %p78 = scmp.ne.s32.totalorder %s70, %s72
    %p79 = scmp.eq.s32.totalorder %s15, 1
    %p80 = por %p78, %p79
    %p81 = scmp.ne.s32.totalorder %s72, %s73
    %p82 = scmp.eq.s32.totalorder %s15, 0
    %p83 = por %p81, %p82
    %p84 = scmp.ne.s32.totalorder %s72, %s73
    %p85 = scmp.eq.s32.totalorder %s16, 1
    %p86 = por %p84, %p85
    %p88 = scmp.ne.s32.totalorder %s73, %s87
    %p89 = scmp.eq.s32.totalorder %s16, 0
    %p90 = por %p88, %p89
    %s92 = sadd.s32 %s91, 1
    %p95 = scmp.eq.s32.totalorder %s10, 1
    %p96 = scmp.ne.s32.totalorder %s91, %s93
    %p97 = scmp.eq.s32.totalorder %s10, 0
    %p98 = por %p96, %p97
    %p99 = scmp.ne.s32.totalorder %s91, %s93
    %p100 = scmp.eq.s32.totalorder %s15, 1
    %p101 = por %p99, %p100
    %p102 = scmp.ne.s32.totalorder %s93, %s94
    %p103 = scmp.eq.s32.totalorder %s15, 0
    %p104 = por %p102, %p103
    %p105 = scmp.ne.s32.totalorder %s93, %s94
    %p106 = scmp.eq.s32.totalorder %s16, 1
    %p107 = por %p105, %p106
    %p109 = scmp.ne.s32.totalorder %s94, %s108
    %p110 = scmp.eq.s32.totalorder %s16, 0
    %p111 = por %p109, %p110
    %s112 = ssub.s32 %s10, %s17
    %p113 = scmp.eq.s32.totalorder %s112, 0
    %s115 = sadd.s32 %s114, 1
    %s116 = scalar_select %p113, %s114, %s115
    %p119 = pneg %p113
    %p120 = scmp.eq.s32.totalorder %s10, 1
    %p121 = por %p119, %p120
    %p122 = scmp.ne.s32.totalorder %s114, %s117
    %p123 = scmp.eq.s32.totalorder %s10, 0
    %p124 = por %p122, %p123
    %p125 = scmp.ne.s32.totalorder %s114, %s117
    %p126 = scmp.eq.s32.totalorder %s15, 1
    %p127 = por %p125, %p126
    %p128 = scmp.ne.s32.totalorder %s117, %s118
    %p129 = scmp.eq.s32.totalorder %s15, 0
    %p130 = por %p128, %p129
    %p131 = scmp.ne.s32.totalorder %s117, %s118
    %p132 = scmp.eq.s32.totalorder %s16, 1
    %p133 = por %p131, %p132
    %p135 = scmp.ne.s32.totalorder %s118, %s134
    %p136 = scmp.eq.s32.totalorder %s16, 0
    %p137 = por %p135, %p136
    %p138 = scmp.le.s32.totalorder 1, %s10
    %p139 = scmp.lt.s32.totalorder %s10, 3
    %p140 = pnand %p138, %p139
    %p141 = pneg %p140
    // Predicated region
    $region9: #{tpu_custom_call.1} parent=5 // pred_check
      _
    $region10: #{tpu_custom_call.1} parent=5 // pred_check_branch
      %143 = sbr.rel (%p140) target = $region12
    $region11: #{tpu_custom_call.1} parent=5 // pred_region
      %s144 = ssub.s32 %s10, 1
      // Predicated region
      $region13: #{tpu_custom_call.1} parent=11 // pred_check
        %p145 = pneg %p83
      $region14: #{tpu_custom_call.1} parent=11 // pred_check_branch
        %147 = sbr.rel (%p145) target = $region16
      $region15: #{tpu_custom_call.1} parent=11 // pred_region
        _
      $region16: #{tpu_custom_call.1} parent=11 // pred_fallthru
        _
      // Predicated region
      $region17: #{tpu_custom_call.1} parent=11 // pred_check
        %p148 = pneg %p104
      $region18: #{tpu_custom_call.1} parent=11 // pred_check_branch
        %150 = sbr.rel (%p148) target = $region20
      $region19: #{tpu_custom_call.1} parent=11 // pred_region
        _
      $region20: #{tpu_custom_call.1} parent=11 // pred_fallthru
        _
    $region12: #{tpu_custom_call.1} parent=5 // pred_fallthru
      _
    %p151 = scmp.lt.s32.totalorder %s10, 2
    // Predicated region
    $region21: #{tpu_custom_call.1} parent=5 // pred_check
      %p152 = pneg %p151
    $region22: #{tpu_custom_call.1} parent=5 // pred_check_branch
      %154 = sbr.rel (%p152) target = $region24
    $region23: #{tpu_custom_call.1} parent=5 // pred_region
      // Predicated region
      $region25: #{tpu_custom_call.1} parent=23 // pred_check
        %p155 = pneg %p30
      $region26: #{tpu_custom_call.1} parent=23 // pred_check_branch
        %157 = sbr.rel (%p155) target = $region28
      $region27: #{tpu_custom_call.1} parent=23 // pred_region
        %p158 = scmp.lt.s32.totalorder %s10, 1
        %s159 = scalar_select %p158, %s10, 1
        %s160 = smul.addr %s159, 2
        %s161 = smul.addr %s160, 4
        %s162 = scalar_lea.vmem %s0, %s161
      $region28: #{tpu_custom_call.1} parent=23 // pred_fallthru
        _
      // Predicated region
      $region29: #{tpu_custom_call.1} parent=23 // pred_check
        %p163 = pneg %p56
      $region30: #{tpu_custom_call.1} parent=23 // pred_check_branch
        %165 = sbr.rel (%p163) target = $region32
      $region31: #{tpu_custom_call.1} parent=23 // pred_region
        %p166 = scmp.lt.s32.totalorder %s10, 1
        %s167 = scalar_select %p166, %s10, 1
        %s168 = smul.addr %s167, 32
        %s169 = smul.addr %s168, 8
        %s170 = scalar_lea.vmem %s1, %s169
      $region32: #{tpu_custom_call.1} parent=23 // pred_fallthru
        _
    $region24: #{tpu_custom_call.1} parent=5 // pred_fallthru
      _
    %p171 = scmp.le.s32.totalorder 1, %s10
    %p172 = scmp.lt.s32.totalorder %s10, 3
    %p173 = pnand %p171, %p172
    %p174 = pneg %p173
    // Predicated region
    $region33: #{tpu_custom_call.1} parent=5 // pred_check
      _
    $region34: #{tpu_custom_call.1} parent=5 // pred_check_branch
      %176 = sbr.rel (%p173) target = $region36
    $region35: #{tpu_custom_call.1} parent=5 // pred_region
      %s177 = ssub.s32 %s10, 1
      %p178 = scmp.lt.s32.totalorder %s15, 1
      %s179 = scalar_select %p178, %s15, 1
      %s180 = smul.addr %s179, 2
      %s181 = smul.addr %s180, 4
      %s182 = scalar_lea.vmem %s0, %s181
      %p183 = pneg %p36
      %p184 = pneg %p33
      %p185 = scmp.lt.s32.totalorder %s15, 1
      %s186 = scalar_select %p185, %s15, 1
      %s187 = smul.addr %s186, 32
      %s188 = smul.addr %s187, 8
      %s189 = scalar_lea.vmem %s1, %s188
      %p190 = pneg %p62
      %p191 = pneg %p59
      %p192 = pneg %p83
      %p193 = pneg %p80
      %p194 = pneg %p104
      %p195 = pneg %p101
      %p196 = pneg %p130
      %p197 = pneg %p127
      %p198 = scmp.lt.s32.totalorder %s15, 1
      %s199 = scalar_select %p198, %s15, 1
      %s200 = smul.addr %s199, 32
      %s201 = smul.addr %s200, 8
      %s202 = scalar_lea.vmem %s4, %s201
      %p203 = scmp.lt.s32.totalorder %s15, 1
      %s204 = scalar_select %p203, %s15, 1
      %s205 = smul.addr %s204, 2
      %s206 = smul.addr %s205, 4
      %s207 = scalar_lea.vmem %s0, %s206
      %p208 = scmp.lt.s32.totalorder %s15, 1
      %s209 = scalar_select %p208, %s15, 1
      %s210 = smul.addr %s209, 32
      %s211 = smul.addr %s210, 8
      %s212 = scalar_lea.vmem %s1, %s211
      %p213 = scmp.lt.s32.totalorder %s15, 1
      %s214 = scalar_select %p213, %s15, 1
      %s215 = smul.addr %s214, 32
      %s216 = smul.addr %s215, 8
      %s217 = scalar_lea.vmem %s4, %s216
      %v218 = vld [vmem:[%s207] sm:$0xff]
      %v219 = vld [vmem:[%s2] sm:$0xff]
      %v220 = vld [vmem:[%s2 + $0x8] sm:$0xff]
      %v221 = vld [vmem:[%s2 + $0x10] sm:$0xf]
      %v222 = vld [vmem:[%s3] sm:$0xff]
      %v223 = vld [vmem:[%s3 + $0x8] sm:$0xff]
      %v224 = vld [vmem:[%s3 + $0x10] sm:$0xf]
      %226 = vset.pattern.permute.xlu0 0
      %227 = vperm.xlu0 %226, %v222
      %v228 = vpop.permute.xlu0 %227
      %231 = vset.pattern.permute.xlu0 0
      %232 = vperm.xlu0 %231, %v223
      %v233 = vpop.permute.xlu0 %232
      %236 = vset.pattern.permute.xlu0 0
      %237 = vperm.xlu0 %236, %v224
      %v238 = vpop.permute.xlu0 %237
      %v241 = vcombine.high %v218, %v218
      %vm242 = vcmask 31744
      %v244 = vsel %vm242, %v219, 0
      %v247 = vsel %vm242, %v220, 0
      %v250 = vsel %vm242, %v221, 0
      %vm252 = vcmask 1043456
      %v253 = vsel %vm252, %v218, 0
      %v255 = vsel %vm252, %v241, 0
      %257 = vmatprep.subr.mxu0 0.0
      %258 = vmatpush1.msra.mxu0 0.0
      %259 = vmatprep.subr.mxu0 0.0
      %260 = vmatpush1.msra.mxu0 0.0
      %261 = vmatprep.subr.mxu0 0.0
      %262 = vmatpush1.msra.mxu0 0.0
      %263 = vmatprep.subr.mxu0 0.0
      %264 = vmatpush1.msra.mxu0 0.0
      %265 = vmatprep.subr.mxu0 0.0
      %266 = vmatpush1.msra.mxu0 0.0
      %267 = vmatprep.subr.mxu0 0.0
      %268 = vmatpush1.msra.mxu0 0.0
      %269 = vmatprep.subr.mxu0 0.0
      %270 = vmatpush1.msra.mxu0 0.0
      %271 = vmatprep.subr.mxu0 0.0
      %272 = vmatpush1.msra.mxu0 0.0
      %273 = vmatprep.subr.mxu0 0.0
      %274 = vmatpush1.msra.mxu0 0.0
      %275 = vmatprep.subr.mxu0 0.0
      %276 = vmatpush1.msra.mxu0 0.0
      %277 = vmatprep.subr.mxu0 0.0
      %278 = vmatpush1.msra.mxu0 0.0
      %279 = vmatprep.subr.mxu0 0.0
      %280 = vmatpush1.msra.mxu0 0.0
      %281 = vmatprep.subr.mxu0 0.0
      %282 = vmatpush1.msra.mxu0 0.0
      %283 = vmatprep.subr.mxu0 0.0
      %284 = vmatpush1.msra.mxu0 0.0
      %285 = vmatprep.subr.mxu0 0.0
      %286 = vmatpush1.msra.mxu0 0.0
      %287 = vmatprep.subr.mxu0 %v255
      %288 = vmatpush1.msra.mxu0 %v253
      %289 = vmatprep.subr.mxu0 0.0
      %290 = vmatpush2.msra.mxu0 0.0
      %291 = vmatprep.subr.mxu0 0.0
      %292 = vmatpush2.msra.mxu0 0.0
      %293 = vmatprep.subr.mxu0 0.0
      %294 = vmatpush2.msra.mxu0 0.0
      %295 = vmatprep.subr.mxu0 0.0
      %296 = vmatpush2.msra.mxu0 0.0
      %297 = vmatprep.subr.mxu0 0.0
      %298 = vmatpush2.msra.mxu0 0.0
      %299 = vmatprep.subr.mxu0 0.0
      %300 = vmatpush2.msra.mxu0 0.0
      %301 = vmatprep.subr.mxu0 0.0
      %302 = vmatpush2.msra.mxu0 0.0
      %303 = vmatprep.subr.mxu0 0.0
      %304 = vmatpush2.msra.mxu0 0.0
      %305 = vmatprep.subr.mxu0 0.0
      %306 = vmatpush2.msra.mxu0 0.0
      %307 = vmatprep.subr.mxu0 0.0
      %308 = vmatpush2.msra.mxu0 0.0
      %309 = vmatprep.subr.mxu0 0.0
      %310 = vmatpush2.msra.mxu0 0.0
      %311 = vmatprep.subr.mxu0 0.0
      %312 = vmatpush2.msra.mxu0 0.0
      %313 = vmatprep.subr.mxu0 0.0
      %314 = vmatpush2.msra.mxu0 0.0
      %315 = vmatprep.subr.mxu0 0.0
      %316 = vmatpush2.msra.mxu0 0.0
      %317 = vmatprep.subr.mxu0 0.0
      %318 = vmatpush2.msra.mxu0 0.0
      %319 = vmatprep.subr.mxu0 0.0
      %320 = vmatpush2.msra.mxu0 0.0
      %321 = vmatprep.mubr.f32.mxu0 0.0
      %322 = vmatmul.mubr.f32.gmra.mxu0 %v244
      %v323 = vpop.f32.mrf.mxu0
      %v324 = vadd.f32 %v228, %v323
      %v325 = vpop.f32.mrf.mxu0
      %v326 = vadd.f32 %v228, %v325
      %327 = vmatprep.mubr.f32.mxu0 0.0
      %328 = vmatmul.mubr.f32.gmra.mxu0 %v247
      %v329 = vpop.f32.mrf.mxu0
      %v330 = vadd.f32 %v233, %v329
      %v331 = vpop.f32.mrf.mxu0
      %v332 = vadd.f32 %v233, %v331
      %333 = vmatprep.mubr.f32.mxu0 0.0
      %334 = vmatmul.mubr.f32.gmra.mxu0 %v250
      %v335 = vpop.f32.mrf.mxu0
      %v336 = vadd.f32 %v238, %v335
      %v337 = vpop.f32.mrf.mxu0
      %v338 = vadd.f32 %v238, %v337
      %339 = vdwg.mxu0
      %340 = vxpose.xlu0.b32.start [1/16] %v324, 128
      %341 = vxpose.xlu0.b32.cont [2/16] 0.0, 128
      %342 = vxpose.xlu0.b32.cont [3/16] 0.0, 128
      %343 = vxpose.xlu0.b32.cont [4/16] 0.0, 128
      %344 = vxpose.xlu0.b32.cont [5/16] 0.0, 128
      %345 = vxpose.xlu0.b32.cont [6/16] 0.0, 128
      %346 = vxpose.xlu0.b32.cont [7/16] 0.0, 128
      %347 = vxpose.xlu0.b32.cont [8/16] 0.0, 128
      %348 = vxpose.xlu0.b32.cont [9/16] 0.0, 128
      %349 = vxpose.xlu0.b32.cont [10/16] 0.0, 128
      %350 = vxpose.xlu0.b32.cont [11/16] 0.0, 128
      %351 = vxpose.xlu0.b32.cont [12/16] 0.0, 128
      %352 = vxpose.xlu0.b32.cont [13/16] 0.0, 128
      %353 = vxpose.xlu0.b32.cont [14/16] 0.0, 128
      %354 = vxpose.xlu0.b32.cont [15/16] 0.0, 128
      %355 = vxpose.xlu0.b32.end [16/16] 0.0, 128
      %v356 = vpop.trf.xlu0
      %v357 = vpop.trf.xlu0
      %v358 = vpop.trf.xlu0
      %v359 = vpop.trf.xlu0
      %v360 = vpop.trf.xlu0
      %v361 = vpop.trf.xlu0
      %v362 = vpop.trf.xlu0
      %v363 = vpop.trf.xlu0
      %v364 = vpop.trf.xlu0
      %v365 = vpop.trf.xlu0
      %v366 = vpop.trf.xlu0
      %v367 = vpop.trf.xlu0
      %v368 = vpop.trf.xlu0
      %v369 = vpop.trf.xlu0
      %v370 = vpop.trf.xlu0
      %v371 = vpop.trf.xlu0
      %372 = vxpose.xlu0.b32.start [1/16] %v326, 128
      %373 = vxpose.xlu0.b32.cont [2/16] 0.0, 128
      %374 = vxpose.xlu0.b32.cont [3/16] 0.0, 128
      %375 = vxpose.xlu0.b32.cont [4/16] 0.0, 128
      %376 = vxpose.xlu0.b32.cont [5/16] 0.0, 128
      %377 = vxpose.xlu0.b32.cont [6/16] 0.0, 128
      %378 = vxpose.xlu0.b32.cont [7/16] 0.0, 128
      %379 = vxpose.xlu0.b32.cont [8/16] 0.0, 128
      %380 = vxpose.xlu0.b32.cont [9/16] 0.0, 128
      %381 = vxpose.xlu0.b32.cont [10/16] 0.0, 128
      %382 = vxpose.xlu0.b32.cont [11/16] 0.0, 128
      %383 = vxpose.xlu0.b32.cont [12/16] 0.0, 128
      %384 = vxpose.xlu0.b32.cont [13/16] 0.0, 128
      %385 = vxpose.xlu0.b32.cont [14/16] 0.0, 128
      %386 = vxpose.xlu0.b32.cont [15/16] 0.0, 128
      %387 = vxpose.xlu0.b32.end [16/16] 0.0, 128
      %v388 = vpop.trf.xlu0
      %v389 = vpop.trf.xlu0
      %v390 = vpop.trf.xlu0
      %v391 = vpop.trf.xlu0
      %v392 = vpop.trf.xlu0
      %v393 = vpop.trf.xlu0
      %v394 = vpop.trf.xlu0
      %v395 = vpop.trf.xlu0
      %v396 = vpop.trf.xlu0
      %v397 = vpop.trf.xlu0
      %v398 = vpop.trf.xlu0
      %v399 = vpop.trf.xlu0
      %v400 = vpop.trf.xlu0
      %v401 = vpop.trf.xlu0
      %v402 = vpop.trf.xlu0
      %v403 = vpop.trf.xlu0
      %vm404 = vcmask 64512
      %v406 = vsel %vm404, %v356, 0
      %v409 = vsel %vm404, %v357, 0
      %v412 = vsel %vm404, %v358, 0
      %v415 = vsel %vm404, %v359, 0
      %v418 = vsel %vm404, %v360, 0
      %v421 = vsel %vm404, %v361, 0
      %v424 = vsel %vm404, %v362, 0
      %v427 = vsel %vm404, %v363, 0
      %v430 = vsel %vm404, %v364, 0
      %v433 = vsel %vm404, %v365, 0
      %v436 = vsel %vm404, %v366, 0
      %v439 = vsel %vm404, %v367, 0
      %v442 = vsel %vm404, %v368, 0
      %v445 = vsel %vm404, %v369, 0
      %v448 = vsel %vm404, %v370, 0
      %v451 = vsel %vm404, %v371, 0
      %v454 = vsel %vm404, %v388, 0
      %v457 = vsel %vm404, %v389, 0
      %v460 = vsel %vm404, %v390, 0
      %v463 = vsel %vm404, %v391, 0
      %v466 = vsel %vm404, %v392, 0
      %v469 = vsel %vm404, %v393, 0
      %v472 = vsel %vm404, %v394, 0
      %v475 = vsel %vm404, %v395, 0
      %v478 = vsel %vm404, %v396, 0
      %v481 = vsel %vm404, %v397, 0
      %v484 = vsel %vm404, %v398, 0
      %v487 = vsel %vm404, %v399, 0
      %v490 = vsel %vm404, %v400, 0
      %v493 = vsel %vm404, %v401, 0
      %v496 = vsel %vm404, %v402, 0
      %v499 = vsel %vm404, %v403, 0
      %501 = vmatprep.subr.mxu0 0.0
      %502 = vmatpush1.msra.mxu0 0.0
      %503 = vmatprep.subr.mxu0 0.0
      %504 = vmatpush1.msra.mxu0 0.0
      %505 = vmatprep.subr.mxu0 0.0
      %506 = vmatpush1.msra.mxu0 0.0
      %507 = vmatprep.subr.mxu0 0.0
      %508 = vmatpush1.msra.mxu0 0.0
      %509 = vmatprep.subr.mxu0 0.0
      %510 = vmatpush1.msra.mxu0 0.0
      %511 = vmatprep.subr.mxu0 0.0
      %512 = vmatpush1.msra.mxu0 0.0
      %513 = vmatprep.subr.mxu0 0.0
      %514 = vmatpush1.msra.mxu0 0.0
      %515 = vmatprep.subr.mxu0 0.0
      %516 = vmatpush1.msra.mxu0 0.0
      %517 = vmatprep.subr.mxu0 0.0
      %518 = vmatpush1.msra.mxu0 0.0
      %519 = vmatprep.subr.mxu0 0.0
      %520 = vmatpush1.msra.mxu0 0.0
      %521 = vmatprep.subr.mxu0 0.0
      %522 = vmatpush1.msra.mxu0 0.0
      %523 = vmatprep.subr.mxu0 0.0
      %524 = vmatpush1.msra.mxu0 0.0
      %525 = vmatprep.subr.mxu0 0.0
      %526 = vmatpush1.msra.mxu0 0.0
      %527 = vmatprep.subr.mxu0 0.0
      %528 = vmatpush1.msra.mxu0 0.0
      %529 = vmatprep.subr.mxu0 0.0
      %530 = vmatpush1.msra.mxu0 0.0
      %531 = vmatprep.subr.mxu0 %v332
      %532 = vmatpush1.msra.mxu0 %v330
      %533 = vmatprep.subr.mxu0 0.0
      %534 = vmatpush2.msra.mxu0 0.0
      %535 = vmatprep.subr.mxu0 0.0
      %536 = vmatpush2.msra.mxu0 0.0
      %537 = vmatprep.subr.mxu0 0.0
      %538 = vmatpush2.msra.mxu0 0.0
      %539 = vmatprep.subr.mxu0 0.0
      %540 = vmatpush2.msra.mxu0 0.0
      %541 = vmatprep.subr.mxu0 0.0
      %542 = vmatpush2.msra.mxu0 0.0
      %543 = vmatprep.subr.mxu0 0.0
      %544 = vmatpush2.msra.mxu0 0.0
      %545 = vmatprep.subr.mxu0 0.0
      %546 = vmatpush2.msra.mxu0 0.0
      %547 = vmatprep.subr.mxu0 0.0
      %548 = vmatpush2.msra.mxu0 0.0
      %549 = vmatprep.subr.mxu0 0.0
      %550 = vmatpush2.msra.mxu0 0.0
      %551 = vmatprep.subr.mxu0 0.0
      %552 = vmatpush2.msra.mxu0 0.0
      %553 = vmatprep.subr.mxu0 0.0
      %554 = vmatpush2.msra.mxu0 0.0
      %555 = vmatprep.subr.mxu0 0.0
      %556 = vmatpush2.msra.mxu0 0.0
      %557 = vmatprep.subr.mxu0 0.0
      %558 = vmatpush2.msra.mxu0 0.0
      %559 = vmatprep.subr.mxu0 0.0
      %560 = vmatpush2.msra.mxu0 0.0
      %561 = vmatprep.subr.mxu0 0.0
      %562 = vmatpush2.msra.mxu0 0.0
      %563 = vmatprep.subr.mxu0 0.0
      %564 = vmatpush2.msra.mxu0 0.0
      %565 = vmatprep.mubr.f32.mxu0 0.0
      %566 = vmatmul.mubr.f32.gmra.mxu0 %v406
      %v567 = vpop.f32.mrf.mxu0
      %v568 = vadd.f32 0.0, %v567
      %v569 = vpop.f32.mrf.mxu0
      %v570 = vadd.f32 0.0, %v569
      %571 = vmatprep.mubr.f32.mxu0 0.0
      %572 = vmatmul.mubr.f32.gmra.mxu0 %v409
      %v573 = vpop.f32.mrf.mxu0
      %v574 = vadd.f32 0.0, %v573
      %v575 = vpop.f32.mrf.mxu0
      %v576 = vadd.f32 0.0, %v575
      %577 = vmatprep.mubr.f32.mxu0 0.0
      %578 = vmatmul.mubr.f32.gmra.mxu0 %v412
      %v579 = vpop.f32.mrf.mxu0
      %v580 = vadd.f32 0.0, %v579
      %v581 = vpop.f32.mrf.mxu0
      %v582 = vadd.f32 0.0, %v581
      %583 = vmatprep.mubr.f32.mxu0 0.0
      %584 = vmatmul.mubr.f32.gmra.mxu0 %v415
      %v585 = vpop.f32.mrf.mxu0
      %v586 = vadd.f32 0.0, %v585
      %v587 = vpop.f32.mrf.mxu0
      %v588 = vadd.f32 0.0, %v587
      %589 = vmatprep.mubr.f32.mxu0 0.0
      %590 = vmatmul.mubr.f32.gmra.mxu0 %v418
      %v591 = vpop.f32.mrf.mxu0
      %v592 = vadd.f32 0.0, %v591
      %v593 = vpop.f32.mrf.mxu0
      %v594 = vadd.f32 0.0, %v593
      %595 = vmatprep.mubr.f32.mxu0 0.0
      %596 = vmatmul.mubr.f32.gmra.mxu0 %v421
      %v597 = vpop.f32.mrf.mxu0
      %v598 = vadd.f32 0.0, %v597
      %v599 = vpop.f32.mrf.mxu0
      %v600 = vadd.f32 0.0, %v599
      %601 = vmatprep.mubr.f32.mxu0 0.0
      %602 = vmatmul.mubr.f32.gmra.mxu0 %v424
      %v603 = vpop.f32.mrf.mxu0
      %v604 = vadd.f32 0.0, %v603
      %v605 = vpop.f32.mrf.mxu0
      %v606 = vadd.f32 0.0, %v605
      %607 = vmatprep.mubr.f32.mxu0 0.0
      %608 = vmatmul.mubr.f32.gmra.mxu0 %v427
      %v609 = vpop.f32.mrf.mxu0
      %v610 = vadd.f32 0.0, %v609
      %v611 = vpop.f32.mrf.mxu0
      %v612 = vadd.f32 0.0, %v611
      %613 = vmatprep.mubr.f32.mxu0 0.0
      %614 = vmatmul.mubr.f32.gmra.mxu0 %v430
      %v615 = vpop.f32.mrf.mxu0
      %v616 = vadd.f32 0.0, %v615
      %v617 = vpop.f32.mrf.mxu0
      %v618 = vadd.f32 0.0, %v617
      %619 = vmatprep.mubr.f32.mxu0 0.0
      %620 = vmatmul.mubr.f32.gmra.mxu0 %v433
      %v621 = vpop.f32.mrf.mxu0
      %v622 = vadd.f32 0.0, %v621
      %v623 = vpop.f32.mrf.mxu0
      %v624 = vadd.f32 0.0, %v623
      %625 = vmatprep.mubr.f32.mxu0 0.0
      %626 = vmatmul.mubr.f32.gmra.mxu0 %v436
      %v627 = vpop.f32.mrf.mxu0
      %v628 = vadd.f32 0.0, %v627
      %v629 = vpop.f32.mrf.mxu0
      %v630 = vadd.f32 0.0, %v629
      %631 = vmatprep.mubr.f32.mxu0 0.0
      %632 = vmatmul.mubr.f32.gmra.mxu0 %v439
      %v633 = vpop.f32.mrf.mxu0
      %v634 = vadd.f32 0.0, %v633
      %v635 = vpop.f32.mrf.mxu0
      %v636 = vadd.f32 0.0, %v635
      %637 = vmatprep.mubr.f32.mxu0 0.0
      %638 = vmatmul.mubr.f32.gmra.mxu0 %v442
      %v639 = vpop.f32.mrf.mxu0
      %v640 = vadd.f32 0.0, %v639
      %v641 = vpop.f32.mrf.mxu0
      %v642 = vadd.f32 0.0, %v641
      %643 = vmatprep.mubr.f32.mxu0 0.0
      %644 = vmatmul.mubr.f32.gmra.mxu0 %v445
      %v645 = vpop.f32.mrf.mxu0
      %v646 = vadd.f32 0.0, %v645
      %v647 = vpop.f32.mrf.mxu0
      %v648 = vadd.f32 0.0, %v647
      %649 = vmatprep.mubr.f32.mxu0 0.0
      %650 = vmatmul.mubr.f32.gmra.mxu0 %v448
      %v651 = vpop.f32.mrf.mxu0
      %v652 = vadd.f32 0.0, %v651
      %v653 = vpop.f32.mrf.mxu0
      %v654 = vadd.f32 0.0, %v653
      %655 = vmatprep.mubr.f32.mxu0 0.0
      %656 = vmatmul.mubr.f32.gmra.mxu0 %v451
      %v657 = vpop.f32.mrf.mxu0
      %v658 = vadd.f32 0.0, %v657
      %v659 = vpop.f32.mrf.mxu0
      %v660 = vadd.f32 0.0, %v659
      %661 = vmatprep.mubr.f32.mxu0 0.0
      %662 = vmatmul.mubr.f32.gmra.mxu0 %v454
      %v663 = vpop.f32.mrf.mxu0
      %v664 = vadd.f32 0.0, %v663
      %v665 = vpop.f32.mrf.mxu0
      %v666 = vadd.f32 0.0, %v665
      %667 = vmatprep.mubr.f32.mxu0 0.0
      %668 = vmatmul.mubr.f32.gmra.mxu0 %v457
      %v669 = vpop.f32.mrf.mxu0
      %v670 = vadd.f32 0.0, %v669
      %v671 = vpop.f32.mrf.mxu0
      %v672 = vadd.f32 0.0, %v671
      %673 = vmatprep.mubr.f32.mxu0 0.0
      %674 = vmatmul.mubr.f32.gmra.mxu0 %v460
      %v675 = vpop.f32.mrf.mxu0
      %v676 = vadd.f32 0.0, %v675
      %v677 = vpop.f32.mrf.mxu0
      %v678 = vadd.f32 0.0, %v677
      %679 = vmatprep.mubr.f32.mxu0 0.0
      %680 = vmatmul.mubr.f32.gmra.mxu0 %v463
      %v681 = vpop.f32.mrf.mxu0
      %v682 = vadd.f32 0.0, %v681
      %v683 = vpop.f32.mrf.mxu0
      %v684 = vadd.f32 0.0, %v683
      %685 = vmatprep.mubr.f32.mxu0 0.0
      %686 = vmatmul.mubr.f32.gmra.mxu0 %v466
      %v687 = vpop.f32.mrf.mxu0
      %v688 = vadd.f32 0.0, %v687
      %v689 = vpop.f32.mrf.mxu0
      %v690 = vadd.f32 0.0, %v689
      %691 = vmatprep.mubr.f32.mxu0 0.0
      %692 = vmatmul.mubr.f32.gmra.mxu0 %v469
      %v693 = vpop.f32.mrf.mxu0
      %v694 = vadd.f32 0.0, %v693
      %v695 = vpop.f32.mrf.mxu0
      %v696 = vadd.f32 0.0, %v695
      %697 = vmatprep.mubr.f32.mxu0 0.0
      %698 = vmatmul.mubr.f32.gmra.mxu0 %v472
      %v699 = vpop.f32.mrf.mxu0
      %v700 = vadd.f32 0.0, %v699
      %v701 = vpop.f32.mrf.mxu0
      %v702 = vadd.f32 0.0, %v701
      %703 = vmatprep.mubr.f32.mxu0 0.0
      %704 = vmatmul.mubr.f32.gmra.mxu0 %v475
      %v705 = vpop.f32.mrf.mxu0
      %v706 = vadd.f32 0.0, %v705
      %v707 = vpop.f32.mrf.mxu0
      %v708 = vadd.f32 0.0, %v707
      %709 = vmatprep.mubr.f32.mxu0 0.0
      %710 = vmatmul.mubr.f32.gmra.mxu0 %v478
      %v711 = vpop.f32.mrf.mxu0
      %v712 = vadd.f32 0.0, %v711
      %v713 = vpop.f32.mrf.mxu0
      %v714 = vadd.f32 0.0, %v713
      %715 = vmatprep.mubr.f32.mxu0 0.0
      %716 = vmatmul.mubr.f32.gmra.mxu0 %v481
      %v717 = vpop.f32.mrf.mxu0
      %v718 = vadd.f32 0.0, %v717
      %v719 = vpop.f32.mrf.mxu0
      %v720 = vadd.f32 0.0, %v719
      %721 = vmatprep.mubr.f32.mxu0 0.0
      %722 = vmatmul.mubr.f32.gmra.mxu0 %v484
      %v723 = vpop.f32.mrf.mxu0
      %v724 = vadd.f32 0.0, %v723
      %v725 = vpop.f32.mrf.mxu0
      %v726 = vadd.f32 0.0, %v725
      %727 = vmatprep.mubr.f32.mxu0 0.0
      %728 = vmatmul.mubr.f32.gmra.mxu0 %v487
      %v729 = vpop.f32.mrf.mxu0
      %v730 = vadd.f32 0.0, %v729
      %v731 = vpop.f32.mrf.mxu0
      %v732 = vadd.f32 0.0, %v731
      %733 = vmatprep.mubr.f32.mxu0 0.0
      %734 = vmatmul.mubr.f32.gmra.mxu0 %v490
      %v735 = vpop.f32.mrf.mxu0
      %v736 = vadd.f32 0.0, %v735
      %v737 = vpop.f32.mrf.mxu0
      %v738 = vadd.f32 0.0, %v737
      %739 = vmatprep.mubr.f32.mxu0 0.0
      %740 = vmatmul.mubr.f32.gmra.mxu0 %v493
      %v741 = vpop.f32.mrf.mxu0
      %v742 = vadd.f32 0.0, %v741
      %v743 = vpop.f32.mrf.mxu0
      %v744 = vadd.f32 0.0, %v743
      %745 = vmatprep.mubr.f32.mxu0 0.0
      %746 = vmatmul.mubr.f32.gmra.mxu0 %v496
      %v747 = vpop.f32.mrf.mxu0
      %v748 = vadd.f32 0.0, %v747
      %v749 = vpop.f32.mrf.mxu0
      %v750 = vadd.f32 0.0, %v749
      %751 = vmatprep.mubr.f32.mxu0 0.0
      %752 = vmatmul.mubr.f32.gmra.mxu0 %v499
      %v753 = vpop.f32.mrf.mxu0
      %v754 = vadd.f32 0.0, %v753
      %v755 = vpop.f32.mrf.mxu0
      %v756 = vadd.f32 0.0, %v755
      %757 = vdwg.mxu0
      %v758 = vmax.f32 %v568, %v580
      %v759 = vmax.f32 %v574, %v586
      %v760 = vmax.f32 %v758, %v592
      %v761 = vmax.f32 %v759, %v598
      %v762 = vmax.f32 %v760, %v604
      %v763 = vmax.f32 %v761, %v610
      %v764 = vmax.f32 %v762, %v616
      %v765 = vmax.f32 %v763, %v622
      %v766 = vmax.f32 %v764, %v628
      %v767 = vmax.f32 %v765, %v634
      %v768 = vmax.f32 %v766, %v640
      %v769 = vmax.f32 %v767, %v646
      %v770 = vmax.f32 %v768, %v652
      %v771 = vmax.f32 %v769, %v658
      %v772 = vmax.f32 %v770, %v664
      %v773 = vmax.f32 %v771, %v670
      %v774 = vmax.f32 %v772, %v676
      %v775 = vmax.f32 %v773, %v682
      %v776 = vmax.f32 %v774, %v688
      %v777 = vmax.f32 %v775, %v694
      %v778 = vmax.f32 %v776, %v700
      %v779 = vmax.f32 %v777, %v706
      %v780 = vmax.f32 %v778, %v712
      %v781 = vmax.f32 %v779, %v718
      %v782 = vmax.f32 %v780, %v724
      %v783 = vmax.f32 %v781, %v730
      %v784 = vmax.f32 %v782, %v736
      %v785 = vmax.f32 %v783, %v742
      %v786 = vmax.f32 %v784, %v748
      %v787 = vmax.f32 %v785, %v754
      %v788 = vmax.f32 %v786, %v787
      %v789 = vrot.slane %v788, 4
      %v790 = vmax.f32 %v788, %v789
      %v791 = vrot.slane %v790, 2
      %v792 = vmax.f32 %v790, %v791
      %v793 = vrot.slane %v792, 1
      %v794 = vmax.f32 %v792, %v793
      %v795 = vmax.f32 %v570, %v582
      %v796 = vmax.f32 %v576, %v588
      %v797 = vmax.f32 %v795, %v594
      %v798 = vmax.f32 %v796, %v600
      %v799 = vmax.f32 %v797, %v606
      %v800 = vmax.f32 %v798, %v612
      %v801 = vmax.f32 %v799, %v618
      %v802 = vmax.f32 %v800, %v624
      %v803 = vmax.f32 %v801, %v630
      %v804 = vmax.f32 %v802, %v636
      %v805 = vmax.f32 %v803, %v642
      %v806 = vmax.f32 %v804, %v648
      %v807 = vmax.f32 %v805, %v654
      %v808 = vmax.f32 %v806, %v660
      %v809 = vmax.f32 %v807, %v666
      %v810 = vmax.f32 %v808, %v672
      %v811 = vmax.f32 %v809, %v678
      %v812 = vmax.f32 %v810, %v684
      %v813 = vmax.f32 %v811, %v690
      %v814 = vmax.f32 %v812, %v696
      %v815 = vmax.f32 %v813, %v702
      %v816 = vmax.f32 %v814, %v708
      %v817 = vmax.f32 %v815, %v714
      %v818 = vmax.f32 %v816, %v720
      %v819 = vmax.f32 %v817, %v726
      %v820 = vmax.f32 %v818, %v732
      %v821 = vmax.f32 %v819, %v738
      %v822 = vmax.f32 %v820, %v744
      %v823 = vmax.f32 %v821, %v750
      %v824 = vmax.f32 %v822, %v756
      %v825 = vmax.f32 %v823, %v824
      %v826 = vrot.slane %v825, 4
      %v827 = vmax.f32 %v825, %v826
      %v828 = vrot.slane %v827, 2
      %v829 = vmax.f32 %v827, %v828
      %v830 = vrot.slane %v829, 1
      %v831 = vmax.f32 %v829, %v830
      %v832 = vsub.f32 %v568, %v794
      %v833 = vsub.f32 %v570, %v831
      %v834 = vsub.f32 %v574, %v794
      %v835 = vsub.f32 %v576, %v831
      %v836 = vsub.f32 %v580, %v794
      %v837 = vsub.f32 %v582, %v831
      %v838 = vsub.f32 %v586, %v794
      %v839 = vsub.f32 %v588, %v831
      %v840 = vsub.f32 %v592, %v794
      %v841 = vsub.f32 %v594, %v831
      %v842 = vsub.f32 %v598, %v794
      %v843 = vsub.f32 %v600, %v831
      %v844 = vsub.f32 %v604, %v794
      %v845 = vsub.f32 %v606, %v831
      %v846 = vsub.f32 %v610, %v794
      %v847 = vsub.f32 %v612, %v831
      %v848 = vsub.f32 %v616, %v794
      %v849 = vsub.f32 %v618, %v831
      %v850 = vsub.f32 %v622, %v794
      %v851 = vsub.f32 %v624, %v831
      %v852 = vsub.f32 %v628, %v794
      %v853 = vsub.f32 %v630, %v831
      %v854 = vsub.f32 %v634, %v794
      %v855 = vsub.f32 %v636, %v831
      %v856 = vsub.f32 %v640, %v794
      %v857 = vsub.f32 %v642, %v831
      %v858 = vsub.f32 %v646, %v794
      %v859 = vsub.f32 %v648, %v831
      %v860 = vsub.f32 %v652, %v794
      %v861 = vsub.f32 %v654, %v831
      %v862 = vsub.f32 %v658, %v794
      %v863 = vsub.f32 %v660, %v831
      %v864 = vsub.f32 %v664, %v794
      %v865 = vsub.f32 %v666, %v831
      %v866 = vsub.f32 %v670, %v794
      %v867 = vsub.f32 %v672, %v831
      %v868 = vsub.f32 %v676, %v794
      %v869 = vsub.f32 %v678, %v831
      %v870 = vsub.f32 %v682, %v794
      %v871 = vsub.f32 %v684, %v831
      %v872 = vsub.f32 %v688, %v794
      %v873 = vsub.f32 %v690, %v831
      %v874 = vsub.f32 %v694, %v794
      %v875 = vsub.f32 %v696, %v831
      %v876 = vsub.f32 %v700, %v794
      %v877 = vsub.f32 %v702, %v831
      %v878 = vsub.f32 %v706, %v794
      %v879 = vsub.f32 %v708, %v831
      %v880 = vsub.f32 %v712, %v794
      %v881 = vsub.f32 %v714, %v831
      %v882 = vsub.f32 %v718, %v794
      %v883 = vsub.f32 %v720, %v831
      %v884 = vsub.f32 %v724, %v794
      %v885 = vsub.f32 %v726, %v831
      %v886 = vsub.f32 %v730, %v794
      %v887 = vsub.f32 %v732, %v831
      %v888 = vsub.f32 %v736, %v794
      %v889 = vsub.f32 %v738, %v831
      %v890 = vsub.f32 %v742, %v794
      %v891 = vsub.f32 %v744, %v831
      %v892 = vsub.f32 %v748, %v794
      %v893 = vsub.f32 %v750, %v831
      %v894 = vsub.f32 %v754, %v794
      %v895 = vsub.f32 %v756, %v831
      %v896 = vmul.f32 %v832, 1.442695
      %v897 = vpow.pop %v896
      %v898 = vmul.f32 %v833, 1.442695
      %v899 = vpow.pop %v898
      %v900 = vmul.f32 %v834, 1.442695
      %v901 = vpow.pop %v900
      %v902 = vmul.f32 %v835, 1.442695
      %v903 = vpow.pop %v902
      %v904 = vmul.f32 %v836, 1.442695
      %v905 = vpow.pop %v904
      %v906 = vmul.f32 %v837, 1.442695
      %v907 = vpow.pop %v906
      %v908 = vmul.f32 %v838, 1.442695
      %v909 = vpow.pop %v908
      %v910 = vmul.f32 %v839, 1.442695
      %v911 = vpow.pop %v910
      %v912 = vmul.f32 %v840, 1.442695
      %v913 = vpow.pop %v912
      %v914 = vmul.f32 %v841, 1.442695
      %v915 = vpow.pop %v914
      %v916 = vmul.f32 %v842, 1.442695
      %v917 = vpow.pop %v916
      %v918 = vmul.f32 %v843, 1.442695
      %v919 = vpow.pop %v918
      %v920 = vmul.f32 %v844, 1.442695
      %v921 = vpow.pop %v920
      %v922 = vmul.f32 %v845, 1.442695
      %v923 = vpow.pop %v922
      %v924 = vmul.f32 %v846, 1.442695
      %v925 = vpow.pop %v924
      %v926 = vmul.f32 %v847, 1.442695
      %v927 = vpow.pop %v926
      %v928 = vmul.f32 %v848, 1.442695
      %v929 = vpow.pop %v928
      %v930 = vmul.f32 %v849, 1.442695
      %v931 = vpow.pop %v930
      %v932 = vmul.f32 %v850, 1.442695
      %v933 = vpow.pop %v932
      %v934 = vmul.f32 %v851, 1.442695
      %v935 = vpow.pop %v934
      %v936 = vmul.f32 %v852, 1.442695
      %v937 = vpow.pop %v936
      %v938 = vmul.f32 %v853, 1.442695
      %v939 = vpow.pop %v938
      %v940 = vmul.f32 %v854, 1.442695
      %v941 = vpow.pop %v940
      %v942 = vmul.f32 %v855, 1.442695
      %v943 = vpow.pop %v942
      %v944 = vmul.f32 %v856, 1.442695
      %v945 = vpow.pop %v944
      %v946 = vmul.f32 %v857, 1.442695
      %v947 = vpow.pop %v946
      %v948 = vmul.f32 %v858, 1.442695
      %v949 = vpow.pop %v948
      %v950 = vmul.f32 %v859, 1.442695
      %v951 = vpow.pop %v950
      %v952 = vmul.f32 %v860, 1.442695
      %v953 = vpow.pop %v952
      %v954 = vmul.f32 %v861, 1.442695
      %v955 = vpow.pop %v954
      %v956 = vmul.f32 %v862, 1.442695
      %v957 = vpow.pop %v956
      %v958 = vmul.f32 %v863, 1.442695
      %v959 = vpow.pop %v958
      %v960 = vmul.f32 %v864, 1.442695
      %v961 = vpow.pop %v960
      %v962 = vmul.f32 %v865, 1.442695
      %v963 = vpow.pop %v962
      %v964 = vmul.f32 %v866, 1.442695
      %v965 = vpow.pop %v964
      %v966 = vmul.f32 %v867, 1.442695
      %v967 = vpow.pop %v966
      %v968 = vmul.f32 %v868, 1.442695
      %v969 = vpow.pop %v968
      %v970 = vmul.f32 %v869, 1.442695
      %v971 = vpow.pop %v970
      %v972 = vmul.f32 %v870, 1.442695
      %v973 = vpow.pop %v972
      %v974 = vmul.f32 %v871, 1.442695
      %v975 = vpow.pop %v974
      %v976 = vmul.f32 %v872, 1.442695
      %v977 = vpow.pop %v976
      %v978 = vmul.f32 %v873, 1.442695
      %v979 = vpow.pop %v978
      %v980 = vmul.f32 %v874, 1.442695
      %v981 = vpow.pop %v980
      %v982 = vmul.f32 %v875, 1.442695
      %v983 = vpow.pop %v982
      %v984 = vmul.f32 %v876, 1.442695
      %v985 = vpow.pop %v984
      %v986 = vmul.f32 %v877, 1.442695
      %v987 = vpow.pop %v986
      %v988 = vmul.f32 %v878, 1.442695
      %v989 = vpow.pop %v988
      %v990 = vmul.f32 %v879, 1.442695
      %v991 = vpow.pop %v990
      %v992 = vmul.f32 %v880, 1.442695
      %v993 = vpow.pop %v992
      %v994 = vmul.f32 %v881, 1.442695
      %v995 = vpow.pop %v994
      %v996 = vmul.f32 %v882, 1.442695
      %v997 = vpow.pop %v996
      %v998 = vmul.f32 %v883, 1.442695
      %v999 = vpow.pop %v998
      %v1000 = vmul.f32 %v884, 1.442695
      %v1001 = vpow.pop %v1000
      %v1002 = vmul.f32 %v885, 1.442695
      %v1003 = vpow.pop %v1002
      %v1004 = vmul.f32 %v886, 1.442695
      %v1005 = vpow.pop %v1004
      %v1006 = vmul.f32 %v887, 1.442695
      %v1007 = vpow.pop %v1006
      %v1008 = vmul.f32 %v888, 1.442695
      %v1009 = vpow.pop %v1008
      %v1010 = vmul.f32 %v889, 1.442695
      %v1011 = vpow.pop %v1010
      %v1012 = vmul.f32 %v890, 1.442695
      %v1013 = vpow.pop %v1012
      %v1014 = vmul.f32 %v891, 1.442695
      %v1015 = vpow.pop %v1014
      %v1016 = vmul.f32 %v892, 1.442695
      %v1017 = vpow.pop %v1016
      %v1018 = vmul.f32 %v893, 1.442695
      %v1019 = vpow.pop %v1018
      %v1020 = vmul.f32 %v894, 1.442695
      %v1021 = vpow.pop %v1020
      %v1022 = vmul.f32 %v895, 1.442695
      %v1023 = vpow.pop %v1022
      %v1024 = vadd.f32 %v897, %v901
      %v1025 = vadd.f32 %v1024, %v905
      %v1026 = vadd.f32 %v1025, %v909
      %v1027 = vadd.f32 %v1026, %v913
      %v1028 = vadd.f32 %v1027, %v917
      %v1029 = vadd.f32 %v1028, %v921
      %v1030 = vadd.f32 %v1029, %v925
      %v1031 = vadd.f32 %v1030, %v929
      %v1032 = vadd.f32 %v1031, %v933
      %v1033 = vadd.f32 %v1032, %v937
      %v1034 = vadd.f32 %v1033, %v941
      %v1035 = vadd.f32 %v1034, %v945
      %v1036 = vadd.f32 %v1035, %v949
      %v1037 = vadd.f32 %v1036, %v953
      %v1038 = vadd.f32 %v1037, %v957
      %v1039 = vadd.f32 %v1038, %v961
      %v1040 = vadd.f32 %v1039, %v965
      %v1041 = vadd.f32 %v1040, %v969
      %v1042 = vadd.f32 %v1041, %v973
      %v1043 = vadd.f32 %v1042, %v977
      %v1044 = vadd.f32 %v1043, %v981
      %v1045 = vadd.f32 %v1044, %v985
      %v1046 = vadd.f32 %v1045, %v989
      %v1047 = vadd.f32 %v1046, %v993
      %v1048 = vadd.f32 %v1047, %v997
      %v1049 = vadd.f32 %v1048, %v1001
      %v1050 = vadd.f32 %v1049, %v1005
      %v1051 = vadd.f32 %v1050, %v1009
      %v1052 = vadd.f32 %v1051, %v1013
      %v1053 = vadd.f32 %v1052, %v1017
      %v1054 = vadd.f32 %v1053, %v1021
      %v1055 = vrot.slane %v1054, 4
      %v1056 = vadd.f32 %v1054, %v1055
      %v1057 = vrot.slane %v1056, 2
      %v1058 = vadd.f32 %v1056, %v1057
      %v1059 = vrot.slane %v1058, 1
      %v1060 = vadd.f32 %v1058, %v1059
      %v1061 = vadd.f32 %v899, %v903
      %v1062 = vadd.f32 %v1061, %v907
      %v1063 = vadd.f32 %v1062, %v911
      %v1064 = vadd.f32 %v1063, %v915
      %v1065 = vadd.f32 %v1064, %v919
      %v1066 = vadd.f32 %v1065, %v923
      %v1067 = vadd.f32 %v1066, %v927
      %v1068 = vadd.f32 %v1067, %v931
      %v1069 = vadd.f32 %v1068, %v935
      %v1070 = vadd.f32 %v1069, %v939
      %v1071 = vadd.f32 %v1070, %v943
      %v1072 = vadd.f32 %v1071, %v947
      %v1073 = vadd.f32 %v1072, %v951
      %v1074 = vadd.f32 %v1073, %v955
      %v1075 = vadd.f32 %v1074, %v959
      %v1076 = vadd.f32 %v1075, %v963
      %v1077 = vadd.f32 %v1076, %v967
      %v1078 = vadd.f32 %v1077, %v971
      %v1079 = vadd.f32 %v1078, %v975
      %v1080 = vadd.f32 %v1079, %v979
      %v1081 = vadd.f32 %v1080, %v983
      %v1082 = vadd.f32 %v1081, %v987
      %v1083 = vadd.f32 %v1082, %v991
      %v1084 = vadd.f32 %v1083, %v995
      %v1085 = vadd.f32 %v1084, %v999
      %v1086 = vadd.f32 %v1085, %v1003
      %v1087 = vadd.f32 %v1086, %v1007
      %v1088 = vadd.f32 %v1087, %v1011
      %v1089 = vadd.f32 %v1088, %v1015
      %v1090 = vadd.f32 %v1089, %v1019
      %v1091 = vadd.f32 %v1090, %v1023
      %v1092 = vrot.slane %v1091, 4
      %v1093 = vadd.f32 %v1091, %v1092
      %v1094 = vrot.slane %v1093, 2
      %v1095 = vadd.f32 %v1093, %v1094
      %v1096 = vrot.slane %v1095, 1
      %v1097 = vadd.f32 %v1095, %v1096
      %v1098 = vrcp.pop %v1060
      %v1099 = vrcp.pop %v1097
      %v1100 = vmul.f32 %v897, %v1098
      %v1101 = vmul.f32 %v899, %v1099
      %v1102 = vmul.f32 %v901, %v1098
      %v1103 = vmul.f32 %v903, %v1099
      %v1104 = vmul.f32 %v905, %v1098
      %v1105 = vmul.f32 %v907, %v1099
      %v1106 = vmul.f32 %v909, %v1098
      %v1107 = vmul.f32 %v911, %v1099
      %v1108 = vmul.f32 %v913, %v1098
      %v1109 = vmul.f32 %v915, %v1099
      %v1110 = vmul.f32 %v917, %v1098
      %v1111 = vmul.f32 %v919, %v1099
      %v1112 = vmul.f32 %v921, %v1098
      %v1113 = vmul.f32 %v923, %v1099
      %v1114 = vmul.f32 %v925, %v1098
      %v1115 = vmul.f32 %v927, %v1099
      %v1116 = vmul.f32 %v929, %v1098
      %v1117 = vmul.f32 %v931, %v1099
      %v1118 = vmul.f32 %v933, %v1098
      %v1119 = vmul.f32 %v935, %v1099
      %v1120 = vmul.f32 %v937, %v1098
      %v1121 = vmul.f32 %v939, %v1099
      %v1122 = vmul.f32 %v941, %v1098
      %v1123 = vmul.f32 %v943, %v1099
      %v1124 = vmul.f32 %v945, %v1098
      %v1125 = vmul.f32 %v947, %v1099
      %v1126 = vmul.f32 %v949, %v1098
      %v1127 = vmul.f32 %v951, %v1099
      %v1128 = vmul.f32 %v953, %v1098
      %v1129 = vmul.f32 %v955, %v1099
      %v1130 = vmul.f32 %v957, %v1098
      %v1131 = vmul.f32 %v959, %v1099
      %v1132 = vmul.f32 %v961, %v1098
      %v1133 = vmul.f32 %v963, %v1099
      %v1134 = vmul.f32 %v965, %v1098
      %v1135 = vmul.f32 %v967, %v1099
      %v1136 = vmul.f32 %v969, %v1098
      %v1137 = vmul.f32 %v971, %v1099
      %v1138 = vmul.f32 %v973, %v1098
      %v1139 = vmul.f32 %v975, %v1099
      %v1140 = vmul.f32 %v977, %v1098
      %v1141 = vmul.f32 %v979, %v1099
      %v1142 = vmul.f32 %v981, %v1098
      %v1143 = vmul.f32 %v983, %v1099
      %v1144 = vmul.f32 %v985, %v1098
      %v1145 = vmul.f32 %v987, %v1099
      %v1146 = vmul.f32 %v989, %v1098
      %v1147 = vmul.f32 %v991, %v1099
      %v1148 = vmul.f32 %v993, %v1098
      %v1149 = vmul.f32 %v995, %v1099
      %v1150 = vmul.f32 %v997, %v1098
      %v1151 = vmul.f32 %v999, %v1099
      %v1152 = vmul.f32 %v1001, %v1098
      %v1153 = vmul.f32 %v1003, %v1099
      %v1154 = vmul.f32 %v1005, %v1098
      %v1155 = vmul.f32 %v1007, %v1099
      %v1156 = vmul.f32 %v1009, %v1098
      %v1157 = vmul.f32 %v1011, %v1099
      %v1158 = vmul.f32 %v1013, %v1098
      %v1159 = vmul.f32 %v1015, %v1099
      %v1160 = vmul.f32 %v1017, %v1098
      %v1161 = vmul.f32 %v1019, %v1099
      %v1162 = vmul.f32 %v1021, %v1098
      %v1163 = vmul.f32 %v1023, %v1099
      %1164 = vmatprep.subr.mxu0 0.0
      %1165 = vmatpush1.xpose.msra.mxu0 0.0
      %1166 = vmatprep.subr.mxu0 0.0
      %1167 = vmatpush1.xpose.msra.mxu0 0.0
      %1168 = vmatprep.subr.mxu0 0.0
      %1169 = vmatpush1.xpose.msra.mxu0 0.0
      %1170 = vmatprep.subr.mxu0 0.0
      %1171 = vmatpush1.xpose.msra.mxu0 0.0
      %1172 = vmatprep.subr.mxu0 0.0
      %1173 = vmatpush1.xpose.msra.mxu0 0.0
      %1174 = vmatprep.subr.mxu0 0.0
      %1175 = vmatpush1.xpose.msra.mxu0 0.0
      %1176 = vmatprep.subr.mxu0 0.0
      %1177 = vmatpush1.xpose.msra.mxu0 0.0
      %1178 = vmatprep.subr.mxu0 0.0
      %1179 = vmatpush1.xpose.msra.mxu0 0.0
      %1180 = vmatprep.subr.mxu0 0.0
      %1181 = vmatpush1.xpose.msra.mxu0 0.0
      %1182 = vmatprep.subr.mxu0 0.0
      %1183 = vmatpush1.xpose.msra.mxu0 0.0
      %1184 = vmatprep.subr.mxu0 0.0
      %1185 = vmatpush1.xpose.msra.mxu0 0.0
      %1186 = vmatprep.subr.mxu0 0.0
      %1187 = vmatpush1.xpose.msra.mxu0 0.0
      %1188 = vmatprep.subr.mxu0 0.0
      %1189 = vmatpush1.xpose.msra.mxu0 0.0
      %1190 = vmatprep.subr.mxu0 0.0
      %1191 = vmatpush1.xpose.msra.mxu0 0.0
      %1192 = vmatprep.subr.mxu0 0.0
      %1193 = vmatpush1.xpose.msra.mxu0 0.0
      %1194 = vmatprep.subr.mxu0 %v338
      %1195 = vmatpush1.xpose.msra.mxu0 %v336
      %1196 = vmatprep.subr.mxu0 0.0
      %1197 = vmatpush2.xpose.msra.mxu0 0.0
      %1198 = vmatprep.subr.mxu0 0.0
      %1199 = vmatpush2.xpose.msra.mxu0 0.0
      %1200 = vmatprep.subr.mxu0 0.0
      %1201 = vmatpush2.xpose.msra.mxu0 0.0
      %1202 = vmatprep.subr.mxu0 0.0
      %1203 = vmatpush2.xpose.msra.mxu0 0.0
      %1204 = vmatprep.subr.mxu0 0.0
      %1205 = vmatpush2.xpose.msra.mxu0 0.0
      %1206 = vmatprep.subr.mxu0 0.0
      %1207 = vmatpush2.xpose.msra.mxu0 0.0
      %1208 = vmatprep.subr.mxu0 0.0
      %1209 = vmatpush2.xpose.msra.mxu0 0.0
      %1210 = vmatprep.subr.mxu0 0.0
      %1211 = vmatpush2.xpose.msra.mxu0 0.0
      %1212 = vmatprep.subr.mxu0 0.0
      %1213 = vmatpush2.xpose.msra.mxu0 0.0
      %1214 = vmatprep.subr.mxu0 0.0
      %1215 = vmatpush2.xpose.msra.mxu0 0.0
      %1216 = vmatprep.subr.mxu0 0.0
      %1217 = vmatpush2.xpose.msra.mxu0 0.0
      %1218 = vmatprep.subr.mxu0 0.0
      %1219 = vmatpush2.xpose.msra.mxu0 0.0
      %1220 = vmatprep.subr.mxu0 0.0
      %1221 = vmatpush2.xpose.msra.mxu0 0.0
      %1222 = vmatprep.subr.mxu0 0.0
      %1223 = vmatpush2.xpose.msra.mxu0 0.0
      %1224 = vmatprep.subr.mxu0 0.0
      %1225 = vmatpush2.xpose.msra.mxu0 0.0
      %1226 = vmatprep.subr.mxu0 0.0
      %1227 = vmatpush2.xpose.msra.mxu0 0.0
      %1228 = vmatprep.mubr.f32.mxu0 %v1101
      %1229 = vmatmul.mubr.f32.gmra.mxu0 %v1100
      %v1230 = vpop.f32.mrf.mxu0
      %v1231 = vadd.f32 0.0, %v1230
      %v1232 = vpop.f32.mrf.mxu0
      %1233 = vmatprep.mubr.f32.mxu0 %v1103
      %1234 = vmatmul.mubr.f32.gmra.mxu0 %v1102
      %v1235 = vpop.f32.mrf.mxu0
      %v1236 = vadd.f32 0.0, %v1235
      %v1237 = vpop.f32.mrf.mxu0
      %1238 = vmatprep.mubr.f32.mxu0 %v1105
      %1239 = vmatmul.mubr.f32.gmra.mxu0 %v1104
      %v1240 = vpop.f32.mrf.mxu0
      %v1241 = vadd.f32 0.0, %v1240
      %v1242 = vpop.f32.mrf.mxu0
      %1243 = vmatprep.mubr.f32.mxu0 %v1107
      %1244 = vmatmul.mubr.f32.gmra.mxu0 %v1106
      %v1245 = vpop.f32.mrf.mxu0
      %v1246 = vadd.f32 0.0, %v1245
      %v1247 = vpop.f32.mrf.mxu0
      %1248 = vmatprep.mubr.f32.mxu0 %v1109
      %1249 = vmatmul.mubr.f32.gmra.mxu0 %v1108
      %v1250 = vpop.f32.mrf.mxu0
      %v1251 = vadd.f32 0.0, %v1250
      %v1252 = vpop.f32.mrf.mxu0
      %1253 = vmatprep.mubr.f32.mxu0 %v1111
      %1254 = vmatmul.mubr.f32.gmra.mxu0 %v1110
      %v1255 = vpop.f32.mrf.mxu0
      %v1256 = vadd.f32 0.0, %v1255
      %v1257 = vpop.f32.mrf.mxu0
      %1258 = vmatprep.mubr.f32.mxu0 %v1113
      %1259 = vmatmul.mubr.f32.gmra.mxu0 %v1112
      %v1260 = vpop.f32.mrf.mxu0
      %v1261 = vadd.f32 0.0, %v1260
      %v1262 = vpop.f32.mrf.mxu0
      %1263 = vmatprep.mubr.f32.mxu0 %v1115
      %1264 = vmatmul.mubr.f32.gmra.mxu0 %v1114
      %v1265 = vpop.f32.mrf.mxu0
      %v1266 = vadd.f32 0.0, %v1265
      %v1267 = vpop.f32.mrf.mxu0
      %1268 = vmatprep.mubr.f32.mxu0 %v1117
      %1269 = vmatmul.mubr.f32.gmra.mxu0 %v1116
      %v1270 = vpop.f32.mrf.mxu0
      %v1271 = vadd.f32 0.0, %v1270
      %v1272 = vpop.f32.mrf.mxu0
      %1273 = vmatprep.mubr.f32.mxu0 %v1119
      %1274 = vmatmul.mubr.f32.gmra.mxu0 %v1118
      %v1275 = vpop.f32.mrf.mxu0
      %v1276 = vadd.f32 0.0, %v1275
      %v1277 = vpop.f32.mrf.mxu0
      %1278 = vmatprep.mubr.f32.mxu0 %v1121
      %1279 = vmatmul.mubr.f32.gmra.mxu0 %v1120
      %v1280 = vpop.f32.mrf.mxu0
      %v1281 = vadd.f32 0.0, %v1280
      %v1282 = vpop.f32.mrf.mxu0
      %1283 = vmatprep.mubr.f32.mxu0 %v1123
      %1284 = vmatmul.mubr.f32.gmra.mxu0 %v1122
      %v1285 = vpop.f32.mrf.mxu0
      %v1286 = vadd.f32 0.0, %v1285
      %v1287 = vpop.f32.mrf.mxu0
      %1288 = vmatprep.mubr.f32.mxu0 %v1125
      %1289 = vmatmul.mubr.f32.gmra.mxu0 %v1124
      %v1290 = vpop.f32.mrf.mxu0
      %v1291 = vadd.f32 0.0, %v1290
      %v1292 = vpop.f32.mrf.mxu0
      %1293 = vmatprep.mubr.f32.mxu0 %v1127
      %1294 = vmatmul.mubr.f32.gmra.mxu0 %v1126
      %v1295 = vpop.f32.mrf.mxu0
      %v1296 = vadd.f32 0.0, %v1295
      %v1297 = vpop.f32.mrf.mxu0
      %1298 = vmatprep.mubr.f32.mxu0 %v1129
      %1299 = vmatmul.mubr.f32.gmra.mxu0 %v1128
      %v1300 = vpop.f32.mrf.mxu0
      %v1301 = vadd.f32 0.0, %v1300
      %v1302 = vpop.f32.mrf.mxu0
      %1303 = vmatprep.mubr.f32.mxu0 %v1131
      %1304 = vmatmul.mubr.f32.gmra.mxu0 %v1130
      %v1305 = vpop.f32.mrf.mxu0
      %v1306 = vadd.f32 0.0, %v1305
      %v1307 = vpop.f32.mrf.mxu0
      %1308 = vmatprep.mubr.f32.mxu0 %v1133
      %1309 = vmatmul.mubr.f32.gmra.mxu0 %v1132
      %v1310 = vpop.f32.mrf.mxu0
      %v1311 = vadd.f32 0.0, %v1310
      %v1312 = vpop.f32.mrf.mxu0
      %1313 = vmatprep.mubr.f32.mxu0 %v1135
      %1314 = vmatmul.mubr.f32.gmra.mxu0 %v1134
      %v1315 = vpop.f32.mrf.mxu0
      %v1316 = vadd.f32 0.0, %v1315
      %v1317 = vpop.f32.mrf.mxu0
      %1318 = vmatprep.mubr.f32.mxu0 %v1137
      %1319 = vmatmul.mubr.f32.gmra.mxu0 %v1136
      %v1320 = vpop.f32.mrf.mxu0
      %v1321 = vadd.f32 0.0, %v1320
      %v1322 = vpop.f32.mrf.mxu0
      %1323 = vmatprep.mubr.f32.mxu0 %v1139
      %1324 = vmatmul.mubr.f32.gmra.mxu0 %v1138
      %v1325 = vpop.f32.mrf.mxu0
      %v1326 = vadd.f32 0.0, %v1325
      %v1327 = vpop.f32.mrf.mxu0
      %1328 = vmatprep.mubr.f32.mxu0 %v1141
      %1329 = vmatmul.mubr.f32.gmra.mxu0 %v1140
      %v1330 = vpop.f32.mrf.mxu0
      %v1331 = vadd.f32 0.0, %v1330
      %v1332 = vpop.f32.mrf.mxu0
      %1333 = vmatprep.mubr.f32.mxu0 %v1143
      %1334 = vmatmul.mubr.f32.gmra.mxu0 %v1142
      %v1335 = vpop.f32.mrf.mxu0
      %v1336 = vadd.f32 0.0, %v1335
      %v1337 = vpop.f32.mrf.mxu0
      %1338 = vmatprep.mubr.f32.mxu0 %v1145
      %1339 = vmatmul.mubr.f32.gmra.mxu0 %v1144
      %v1340 = vpop.f32.mrf.mxu0
      %v1341 = vadd.f32 0.0, %v1340
      %v1342 = vpop.f32.mrf.mxu0
      %1343 = vmatprep.mubr.f32.mxu0 %v1147
      %1344 = vmatmul.mubr.f32.gmra.mxu0 %v1146
      %v1345 = vpop.f32.mrf.mxu0
      %v1346 = vadd.f32 0.0, %v1345
      %v1347 = vpop.f32.mrf.mxu0
      %1348 = vmatprep.mubr.f32.mxu0 %v1149
      %1349 = vmatmul.mubr.f32.gmra.mxu0 %v1148
      %v1350 = vpop.f32.mrf.mxu0
      %v1351 = vadd.f32 0.0, %v1350
      %v1352 = vpop.f32.mrf.mxu0
      %1353 = vmatprep.mubr.f32.mxu0 %v1151
      %1354 = vmatmul.mubr.f32.gmra.mxu0 %v1150
      %v1355 = vpop.f32.mrf.mxu0
      %v1356 = vadd.f32 0.0, %v1355
      %v1357 = vpop.f32.mrf.mxu0
      %1358 = vmatprep.mubr.f32.mxu0 %v1153
      %1359 = vmatmul.mubr.f32.gmra.mxu0 %v1152
      %v1360 = vpop.f32.mrf.mxu0
      %v1361 = vadd.f32 0.0, %v1360
      %v1362 = vpop.f32.mrf.mxu0
      %1363 = vmatprep.mubr.f32.mxu0 %v1155
      %1364 = vmatmul.mubr.f32.gmra.mxu0 %v1154
      %v1365 = vpop.f32.mrf.mxu0
      %v1366 = vadd.f32 0.0, %v1365
      %v1367 = vpop.f32.mrf.mxu0
      %1368 = vmatprep.mubr.f32.mxu0 %v1157
      %1369 = vmatmul.mubr.f32.gmra.mxu0 %v1156
      %v1370 = vpop.f32.mrf.mxu0
      %v1371 = vadd.f32 0.0, %v1370
      %v1372 = vpop.f32.mrf.mxu0
      %1373 = vmatprep.mubr.f32.mxu0 %v1159
      %1374 = vmatmul.mubr.f32.gmra.mxu0 %v1158
      %v1375 = vpop.f32.mrf.mxu0
      %v1376 = vadd.f32 0.0, %v1375
      %v1377 = vpop.f32.mrf.mxu0
      %1378 = vmatprep.mubr.f32.mxu0 %v1161
      %1379 = vmatmul.mubr.f32.gmra.mxu0 %v1160
      %v1380 = vpop.f32.mrf.mxu0
      %v1381 = vadd.f32 0.0, %v1380
      %v1382 = vpop.f32.mrf.mxu0
      %1383 = vmatprep.mubr.f32.mxu0 %v1163
      %1384 = vmatmul.mubr.f32.gmra.mxu0 %v1162
      %v1385 = vpop.f32.mrf.mxu0
      %v1386 = vadd.f32 0.0, %v1385
      %v1387 = vpop.f32.mrf.mxu0
      %1388 = vdwg.mxu0
      %v1389 = vld [vmem:[%s212] sm:$0xff]
      %v1390 = vld [vmem:[%s212 + $0x8] sm:$0xff]
      %v1391 = vld [vmem:[%s212 + $0x10] sm:$0xff]
      %v1392 = vld [vmem:[%s212 + $0x18] sm:$0xff]
      %v1393 = vld [vmem:[%s212 + $0x20] sm:$0xff]
      %v1394 = vld [vmem:[%s212 + $0x28] sm:$0xff]
      %v1395 = vld [vmem:[%s212 + $0x30] sm:$0xff]
      %v1396 = vld [vmem:[%s212 + $0x38] sm:$0xff]
      %v1397 = vld [vmem:[%s212 + $0x40] sm:$0xff]
      %v1398 = vld [vmem:[%s212 + $0x48] sm:$0xff]
      %v1399 = vld [vmem:[%s212 + $0x50] sm:$0xff]
      %v1400 = vld [vmem:[%s212 + $0x58] sm:$0xff]
      %v1401 = vld [vmem:[%s212 + $0x60] sm:$0xff]
      %v1402 = vld [vmem:[%s212 + $0x68] sm:$0xff]
      %v1403 = vld [vmem:[%s212 + $0x70] sm:$0xff]
      %v1404 = vld [vmem:[%s212 + $0x78] sm:$0xff]
      %v1405 = vld [vmem:[%s212 + $0x80] sm:$0xff]
      %v1406 = vld [vmem:[%s212 + $0x88] sm:$0xff]
      %v1407 = vld [vmem:[%s212 + $0x90] sm:$0xff]
      %v1408 = vld [vmem:[%s212 + $0x98] sm:$0xff]
      %v1409 = vld [vmem:[%s212 + $0xa0] sm:$0xff]
      %v1410 = vld [vmem:[%s212 + $0xa8] sm:$0xff]
      %v1411 = vld [vmem:[%s212 + $0xb0] sm:$0xff]
      %v1412 = vld [vmem:[%s212 + $0xb8] sm:$0xff]
      %v1413 = vld [vmem:[%s212 + $0xc0] sm:$0xff]
      %v1414 = vld [vmem:[%s212 + $0xc8] sm:$0xff]
      %v1415 = vld [vmem:[%s212 + $0xd0] sm:$0xff]
      %v1416 = vld [vmem:[%s212 + $0xd8] sm:$0xff]
      %v1417 = vld [vmem:[%s212 + $0xe0] sm:$0xff]
      %v1418 = vld [vmem:[%s212 + $0xe8] sm:$0xff]
      %v1419 = vld [vmem:[%s212 + $0xf0] sm:$0xff]
      %v1420 = vld [vmem:[%s212 + $0xf8] sm:$0xff]
      %v1421 = vmul.f32 %v1231, 0.1
      %v1422 = vmul.f32 %v1236, 0.1
      %v1423 = vmul.f32 %v1241, 0.1
      %v1424 = vmul.f32 %v1246, 0.1
      %v1425 = vmul.f32 %v1251, 0.1
      %v1426 = vmul.f32 %v1256, 0.1
      %v1427 = vmul.f32 %v1261, 0.1
      %v1428 = vmul.f32 %v1266, 0.1
      %v1429 = vmul.f32 %v1271, 0.1
      %v1430 = vmul.f32 %v1276, 0.1
      %v1431 = vmul.f32 %v1281, 0.1
      %v1432 = vmul.f32 %v1286, 0.1
      %v1433 = vmul.f32 %v1291, 0.1
      %v1434 = vmul.f32 %v1296, 0.1
      %v1435 = vmul.f32 %v1301, 0.1
      %v1436 = vmul.f32 %v1306, 0.1
      %v1437 = vmul.f32 %v1311, 0.1
      %v1438 = vmul.f32 %v1316, 0.1
      %v1439 = vmul.f32 %v1321, 0.1
      %v1440 = vmul.f32 %v1326, 0.1
      %v1441 = vmul.f32 %v1331, 0.1
      %v1442 = vmul.f32 %v1336, 0.1
      %v1443 = vmul.f32 %v1341, 0.1
      %v1444 = vmul.f32 %v1346, 0.1
      %v1445 = vmul.f32 %v1351, 0.1
      %v1446 = vmul.f32 %v1356, 0.1
      %v1447 = vmul.f32 %v1361, 0.1
      %v1448 = vmul.f32 %v1366, 0.1
      %v1449 = vmul.f32 %v1371, 0.1
      %v1450 = vmul.f32 %v1376, 0.1
      %v1451 = vmul.f32 %v1381, 0.1
      %v1452 = vmul.f32 %v1386, 0.1
      %v1453 = vadd.f32 %v1389, %v1421
      %v1454 = vadd.f32 %v1390, %v1422
      %v1455 = vadd.f32 %v1391, %v1423
      %v1456 = vadd.f32 %v1392, %v1424
      %v1457 = vadd.f32 %v1393, %v1425
      %v1458 = vadd.f32 %v1394, %v1426
      %v1459 = vadd.f32 %v1395, %v1427
      %v1460 = vadd.f32 %v1396, %v1428
      %v1461 = vadd.f32 %v1397, %v1429
      %v1462 = vadd.f32 %v1398, %v1430
      %v1463 = vadd.f32 %v1399, %v1431
      %v1464 = vadd.f32 %v1400, %v1432
      %v1465 = vadd.f32 %v1401, %v1433
      %v1466 = vadd.f32 %v1402, %v1434
      %v1467 = vadd.f32 %v1403, %v1435
      %v1468 = vadd.f32 %v1404, %v1436
      %v1469 = vadd.f32 %v1405, %v1437
      %v1470 = vadd.f32 %v1406, %v1438
      %v1471 = vadd.f32 %v1407, %v1439
      %v1472 = vadd.f32 %v1408, %v1440
      %v1473 = vadd.f32 %v1409, %v1441
      %v1474 = vadd.f32 %v1410, %v1442
      %v1475 = vadd.f32 %v1411, %v1443
      %v1476 = vadd.f32 %v1412, %v1444
      %v1477 = vadd.f32 %v1413, %v1445
      %v1478 = vadd.f32 %v1414, %v1446
      %v1479 = vadd.f32 %v1415, %v1447
      %v1480 = vadd.f32 %v1416, %v1448
      %v1481 = vadd.f32 %v1417, %v1449
      %v1482 = vadd.f32 %v1418, %v1450
      %v1483 = vadd.f32 %v1419, %v1451
      %v1484 = vadd.f32 %v1420, %v1452
      %1485 = vst.msk [vmem:[%s217] sm:$0xff] %vm242, %v1453
      %1486 = vst.msk [vmem:[%s217 + $0x8] sm:$0xff] %vm242, %v1454
      %1487 = vst.msk [vmem:[%s217 + $0x10] sm:$0xff] %vm242, %v1455
      %1488 = vst.msk [vmem:[%s217 + $0x18] sm:$0xff] %vm242, %v1456
      %1489 = vst.msk [vmem:[%s217 + $0x20] sm:$0xff] %vm242, %v1457
      %1490 = vst.msk [vmem:[%s217 + $0x28] sm:$0xff] %vm242, %v1458
      %1491 = vst.msk [vmem:[%s217 + $0x30] sm:$0xff] %vm242, %v1459
      %1492 = vst.msk [vmem:[%s217 + $0x38] sm:$0xff] %vm242, %v1460
      %1493 = vst.msk [vmem:[%s217 + $0x40] sm:$0xff] %vm242, %v1461
      %1494 = vst.msk [vmem:[%s217 + $0x48] sm:$0xff] %vm242, %v1462
      %1495 = vst.msk [vmem:[%s217 + $0x50] sm:$0xff] %vm242, %v1463
      %1496 = vst.msk [vmem:[%s217 + $0x58] sm:$0xff] %vm242, %v1464
      %1497 = vst.msk [vmem:[%s217 + $0x60] sm:$0xff] %vm242, %v1465
      %1498 = vst.msk [vmem:[%s217 + $0x68] sm:$0xff] %vm242, %v1466
      %1499 = vst.msk [vmem:[%s217 + $0x70] sm:$0xff] %vm242, %v1467
      %1500 = vst.msk [vmem:[%s217 + $0x78] sm:$0xff] %vm242, %v1468
      %1501 = vst.msk [vmem:[%s217 + $0x80] sm:$0xff] %vm242, %v1469
      %1502 = vst.msk [vmem:[%s217 + $0x88] sm:$0xff] %vm242, %v1470
      %1503 = vst.msk [vmem:[%s217 + $0x90] sm:$0xff] %vm242, %v1471
      %1504 = vst.msk [vmem:[%s217 + $0x98] sm:$0xff] %vm242, %v1472
      %1505 = vst.msk [vmem:[%s217 + $0xa0] sm:$0xff] %vm242, %v1473
      %1506 = vst.msk [vmem:[%s217 + $0xa8] sm:$0xff] %vm242, %v1474
      %1507 = vst.msk [vmem:[%s217 + $0xb0] sm:$0xff] %vm242, %v1475
      %1508 = vst.msk [vmem:[%s217 + $0xb8] sm:$0xff] %vm242, %v1476
      %1509 = vst.msk [vmem:[%s217 + $0xc0] sm:$0xff] %vm242, %v1477
      %1510 = vst.msk [vmem:[%s217 + $0xc8] sm:$0xff] %vm242, %v1478
      %1511 = vst.msk [vmem:[%s217 + $0xd0] sm:$0xff] %vm242, %v1479
      %1512 = vst.msk [vmem:[%s217 + $0xd8] sm:$0xff] %vm242, %v1480
      %1513 = vst.msk [vmem:[%s217 + $0xe0] sm:$0xff] %vm242, %v1481
      %1514 = vst.msk [vmem:[%s217 + $0xe8] sm:$0xff] %vm242, %v1482
      %1515 = vst.msk [vmem:[%s217 + $0xf0] sm:$0xff] %vm242, %v1483
      %1516 = vst.msk [vmem:[%s217 + $0xf8] sm:$0xff] %vm242, %v1484
      %p1517 = scmp.lt.s32.totalorder %s15, 1
      %s1518 = scalar_select %p1517, %s15, 1
      %s1519 = smul.addr %s1518, 32
      %s1520 = smul.addr %s1519, 8
      %s1521 = scalar_lea.vmem %s4, %s1520
      // Predicated region
      $region37: #{tpu_custom_call.1} parent=35 // pred_check
        %p1522 = pneg %p127
      $region38: #{tpu_custom_call.1} parent=35 // pred_check_branch
        %1524 = sbr.rel (%p1522) target = $region40
      $region39: #{tpu_custom_call.1} parent=35 // pred_region
        _
      $region40: #{tpu_custom_call.1} parent=35 // pred_fallthru
        _
    $region36: #{tpu_custom_call.1} parent=5 // pred_fallthru
      _
    %p1525 = scmp.le.s32.totalorder 2, %s10
    // Predicated region
    $region41: #{tpu_custom_call.1} parent=5 // pred_check
      %p1526 = pneg %p1525
    $region42: #{tpu_custom_call.1} parent=5 // pred_check_branch
      %1528 = sbr.rel (%p1526) target = $region44
    $region43: #{tpu_custom_call.1} parent=5 // pred_region
      %s1529 = ssub.s32 %s10, 2
      // Predicated region
      $region45: #{tpu_custom_call.1} parent=43 // pred_check
        %p1530 = pneg %p133
      $region46: #{tpu_custom_call.1} parent=43 // pred_check_branch
        %1532 = sbr.rel (%p1530) target = $region48
      $region47: #{tpu_custom_call.1} parent=43 // pred_region
        %p1533 = scmp.lt.s32.totalorder %s16, 1
        %s1534 = scalar_select %p1533, %s16, 1
        %s1535 = smul.addr %s1534, 32
        %s1536 = smul.addr %s1535, 8
        %s1537 = scalar_lea.vmem %s4, %s1536
      $region48: #{tpu_custom_call.1} parent=43 // pred_fallthru
        _
    $region44: #{tpu_custom_call.1} parent=5 // pred_fallthru
      _
  $region6: #{tpu_custom_call.1} parent=0 // loop_footer
    %s14 = sadd.s32 1, %s10
  $region7: #{tpu_custom_call.1} parent=0 // loop_footer_branch
    %9 = sbr.rel target = $region3
  $region8: #{tpu_custom_call.1} parent=0 // loop_exit
    _

</llo_original>
